<compile_context>
chip_gen: v5e
topology: v5e:2x2
jax: 0.10.0
libtpu: 0.0.40
codegen_flags: <defaults>
</compile_context>

<pallas_src>
import math

import jax
import jax.numpy as jnp
from jax import lax
from jax.experimental import pallas as pl
from jax.experimental.pallas import tpu as pltpu

_LN_EPS = 1e-5          # torch.nn.LayerNorm default eps
_MAX_ROW_TILE = 512     # roofline-optimal row tile for the (rows, C) kernels

# Set to jnp.bfloat16 for v6e/v7x throughput runs (f32 accumulation is kept);
# left at f32 so the 1e-4 numerical parity check below holds.
_MATMUL_IN_DTYPE = jnp.float32


def _mxin(t):
    """Cast a matmul operand to the MXU input dtype (identity for f32)."""
    return t if _MATMUL_IN_DTYPE == jnp.float32 else t.astype(_MATMUL_IN_DTYPE)


def _layernorm(x, gamma, beta):
    # torch.nn.LayerNorm semantics: biased variance over the last dim.
    mean = jnp.mean(x, axis=-1, keepdims=True)
    var = jnp.mean(jnp.square(x - mean), axis=-1, keepdims=True)
    return (x - mean) * lax.rsqrt(var + _LN_EPS) * gamma + beta


def _erf(x):
    # Abramowitz & Stegun 7.1.26 rational approximation (|err| < 1.5e-7) --
    # used for the exact (erf-based) torch GELU; error is below f32/1e-4 tol.
    # NOTE: the divide is kept exact (not pl.reciprocal(approx=True)) so the
    # kernel matches the exact-division reference within 1e-4.
    a1, a2, a3, a4, a5 = 0.254829592, -0.284496736, 1.421413741, -1.453152027, 1.061405429
    p = 0.3275911
    s = jnp.sign(x)
    ax = jnp.abs(x)
    t = 1.0 / (1.0 + p * ax)
    poly = ((((a5 * t + a4) * t + a3) * t + a2) * t + a1) * t
    return s * (1.0 - poly * jnp.exp(-ax * ax))


def _gelu_exact(x):
    return 0.5 * x * (1.0 + _erf(x * (1.0 / math.sqrt(2.0))))


# -----------------------------------------------------------------------------
# Row-tiling helpers: pick the largest tile (<=512) and pad instead of
# asserting divisibility; padded rows are zeros (LN/GELU stay finite) and are
# sliced off afterwards.
# -----------------------------------------------------------------------------
def _round_up(n, m):
    return ((n + m - 1) // m) * m


def _pick_row_tiling(n):
    if n >= _MAX_ROW_TILE:
        tile = _MAX_ROW_TILE
        n_pad = _round_up(n, tile)
    else:
        tile = _round_up(n, 8)          # single grid step, sublane aligned
        n_pad = tile
    return tile, n_pad


def _pad_rows(x, n_pad):
    n = x.shape[0]
    if n_pad == n:
        return x
    return jnp.pad(x, ((0, n_pad - n), (0, 0)))


def _compiler_params(semantics, resident_bytes):
    # Explicit VMEM budget (v7x default scoped limit is 32 MiB of 64 MiB
    # physical).  The limit is a cap, not a reservation, so 32-64 MiB is safe
    # on every generation; at production C on v7x additionally single-buffer
    # the constant-index weight blocks or K-tile the hidden dimension.
    budget = int(max(32 << 20, min(64 << 20, 2 * resident_bytes + (8 << 20))))
    return pltpu.CompilerParams(dimension_semantics=semantics,
                                vmem_limit_bytes=budget)


# -----------------------------------------------------------------------------
# Kernel 1: fused LayerNorm(C) + QKV projection   (N, C) -> (N, 3C)
# -----------------------------------------------------------------------------
def _ln_qkv_kernel(x_ref, g_ref, b_ref, w_ref, o_ref):
    xn = _layernorm(x_ref[...], g_ref[...], b_ref[...])
    o_ref[...] = jnp.dot(_mxin(xn), _mxin(w_ref[...]),
                         preferred_element_type=jnp.float32)


def ln_qkv(x2d, gamma, beta, w_qkv):
    n, c = x2d.shape
    c3 = w_qkv.shape[1]
    tile, n_pad = _pick_row_tiling(n)
    xp = _pad_rows(x2d, n_pad)
    resident = 8 * (w_qkv.size + tile * (c + c3))   # ~2x f32 bytes (dbl-buffered)
    out = pl.pallas_call(
        _ln_qkv_kernel,
        out_shape=jax.ShapeDtypeStruct((n_pad, c3), jnp.float32),
        grid_spec=pltpu.PrefetchScalarGridSpec(
            num_scalar_prefetch=0,
            grid=(n_pad // tile,),
            in_specs=[
                pl.BlockSpec((tile, c), lambda i: (i, 0)),
                pl.BlockSpec((1, c), lambda i: (0, 0)),
                pl.BlockSpec((1, c), lambda i: (0, 0)),
                # TODO(synk): at production C on v7x single-buffer this
                # constant-index weight block (pl.Buffered(1)) or split the 3C
                # output over a grid axis to respect the 32/64 MiB VMEM budget.
                pl.BlockSpec((c, c3), lambda i: (0, 0)),
            ],
            out_specs=pl.BlockSpec((tile, c3), lambda i: (i, 0)),
        ),
        compiler_params=_compiler_params(("parallel",), resident),
    )(xp, gamma, beta, w_qkv)
    return out[:n] if n_pad != n else out


# -----------------------------------------------------------------------------
# Kernel 2: attention over the ensemble axis E, ALL heads of one batch element
# per grid step (block (1, NH, E, D)).
#   cosine-LayerNorm(D) on q,k -> per-head scale -> scores -> softmax -> @V
# -----------------------------------------------------------------------------
def _attn_kernel(q_ref, k_ref, v_ref, g_ref, b_ref, s_ref, o_ref):
    q = q_ref[0]            # (NH, E, D)
    k = k_ref[0]
    v = v_ref[0]
    g = g_ref[...]          # (1, D)   broadcasts over (NH, E, D)
    bb = b_ref[...]
    s = s_ref[...]          # (NH, 1, D)  per-head scale, lane-broadcast over D
    qn = _layernorm(q, g, bb) * s
    kn = _layernorm(k, g, bb) * s
    # Transposed contraction over D -- no explicit kn.T materialization.
    scores = jnp.einsum("hed,hfd->hef", _mxin(qn), _mxin(kn),
                        preferred_element_type=jnp.float32)        # (NH, E, E)
    scores = scores - jnp.max(scores, axis=-1, keepdims=True)
    p = jnp.exp(scores)
    p = p * pl.reciprocal(jnp.sum(p, axis=-1, keepdims=True), approx=False)
    o_ref[0] = jnp.einsum("hef,hfd->hed", _mxin(p), _mxin(v),
                          preferred_element_type=jnp.float32)      # (NH, E, D)


def ens_attention_core(q, k, v, cos_g, cos_b, scale_rows):
    B, NH, E, D = q.shape
    resident = 8 * (4 * NH * E * D + NH * D + 2 * D)
    return pl.pallas_call(
        _attn_kernel,
        out_shape=jax.ShapeDtypeStruct((B, NH, E, D), jnp.float32),
        grid_spec=pltpu.PrefetchScalarGridSpec(
            num_scalar_prefetch=0,
            grid=(B,),
            in_specs=[
                pl.BlockSpec((1, NH, E, D), lambda bi: (bi, 0, 0, 0)),
                pl.BlockSpec((1, NH, E, D), lambda bi: (bi, 0, 0, 0)),
                pl.BlockSpec((1, NH, E, D), lambda bi: (bi, 0, 0, 0)),
                pl.BlockSpec((1, D), lambda bi: (0, 0)),
                pl.BlockSpec((1, D), lambda bi: (0, 0)),
                pl.BlockSpec((NH, 1, D), lambda bi: (0, 0, 0)),
            ],
            out_specs=pl.BlockSpec((1, NH, E, D), lambda bi: (bi, 0, 0, 0)),
        ),
        # grid=(B,) keeps >=2 'parallel' steps so both v7x TensorCores get
        # work; on v5e/v6e (single TC) a short grid is pure overhead removal.
        compiler_params=_compiler_params(("parallel",), resident),
    )(q, k, v, cos_g, cos_b, scale_rows)


# -----------------------------------------------------------------------------
# Kernel 3: fused attention out-projection + residual + MLP block.
#   y = x + attn @ Wo + bo ;  out = y + gelu(LN(y) @ Wi + bi) @ W2 + b2
# -----------------------------------------------------------------------------
def _out_mlp_kernel(x_ref, a_ref, wo_ref, bo_ref, g_ref, b_ref,
                    wi_ref, bi_ref, w2_ref, b2_ref, o_ref):
    x = x_ref[...]
    a = a_ref[...]
    y = x + jnp.dot(_mxin(a), _mxin(wo_ref[...]),
                    preferred_element_type=jnp.float32) + bo_ref[...]
    yn = _layernorm(y, g_ref[...], b_ref[...])
    h = jnp.dot(_mxin(yn), _mxin(wi_ref[...]),
                preferred_element_type=jnp.float32) + bi_ref[...]
    h = _gelu_exact(h)   # f32 elementwise (v5e VPU/EUP have no bf16 path)
    o_ref[...] = y + jnp.dot(_mxin(h), _mxin(w2_ref[...]),
                             preferred_element_type=jnp.float32) + b2_ref[...]


def out_proj_residual_mlp(x2d, a2d, p):
    n, c = x2d.shape
    hid = p["w_in"].shape[1]
    tile, n_pad = _pick_row_tiling(n)
    xp = _pad_rows(x2d, n_pad)
    ap = _pad_rows(a2d, n_pad)
    resident = 8 * (p["w_out"].size + p["w_in"].size + p["w_out2"].size
                    + tile * (3 * c + hid))
    out = pl.pallas_call(
        _out_mlp_kernel,
        out_shape=jax.ShapeDtypeStruct((n_pad, c), jnp.float32),
        grid_spec=pltpu.PrefetchScalarGridSpec(
            num_scalar_prefetch=0,
            grid=(n_pad // tile,),
            in_specs=[
                pl.BlockSpec((tile, c), lambda i: (i, 0)),
                pl.BlockSpec((tile, c), lambda i: (i, 0)),
                # TODO(synk): at production C on v7x, single-buffer these
                # constant-index weight blocks (pl.Buffered(1)) or tile the
                # hidden dim with an extra 'arbitrary' grid axis + accumulator.
                pl.BlockSpec((c, c), lambda i: (0, 0)),
                pl.BlockSpec((1, c), lambda i: (0, 0)),
                pl.BlockSpec((1, c), lambda i: (0, 0)),
                pl.BlockSpec((1, c), lambda i: (0, 0)),
                pl.BlockSpec((c, hid), lambda i: (0, 0)),
                pl.BlockSpec((1, hid), lambda i: (0, 0)),
                pl.BlockSpec((hid, c), lambda i: (0, 0)),
                pl.BlockSpec((1, c), lambda i: (0, 0)),
            ],
            out_specs=pl.BlockSpec((tile, c), lambda i: (i, 0)),
        ),
        compiler_params=_compiler_params(("parallel",), resident),
    )(xp, ap, p["w_out"], p["b_out"], p["mlp_ln_g"], p["mlp_ln_b"],
      p["w_in"], p["b_in"], p["w_out2"], p["b_out2"])
    return out[:n] if n_pad != n else out


# -----------------------------------------------------------------------------
# Parameters (deterministic, synthetic; shapes per the PyTorch __init__)
# -----------------------------------------------------------------------------
def init_params(key, n_data_shape, n_heads, mlp_mult):
    t, h, w, c = n_data_shape
    assert c % n_heads == 0
    ca = c // n_heads
    D = t * h * w * ca
    hid = int(c * mlp_mult)
    ks = jax.random.split(key, 8)
    p = {
        # EnsAttention
        "in_ln_g": jnp.ones((1, c), jnp.float32),
        "in_ln_b": jnp.zeros((1, c), jnp.float32),
        "w_qkv": (jax.random.normal(ks[0], (c, 3 * c), jnp.float32) / math.sqrt(c)),
        "cos_ln_g": jnp.ones((1, D), jnp.float32),
        "cos_ln_b": jnp.zeros((1, D), jnp.float32),
        # scaling_factor: (n_heads, 1, 1) filled with 1/sqrt(attention_dim);
        # stored broadcast over D as (n_heads, 1, D) for a lane-friendly block.
        "scale": jnp.full((n_heads, 1, D), 1.0 / math.sqrt(D), jnp.float32),
        "w_out": jax.random.normal(ks[1], (c, c), jnp.float32) * 1e-5,
        "b_out": jax.random.normal(ks[2], (1, c), jnp.float32) * 0.02,
        # MLPBlock
        "mlp_ln_g": jnp.ones((1, c), jnp.float32),
        "mlp_ln_b": jnp.zeros((1, c), jnp.float32),
        "w_in": (jax.random.normal(ks[3], (c, hid), jnp.float32) / math.sqrt(c)),
        "b_in": jax.random.normal(ks[4], (1, hid), jnp.float32) * 0.02,
        "w_out2": jax.random.normal(ks[5], (hid, c), jnp.float32) * 1e-5,
        "b_out2": jax.random.normal(ks[6], (1, c), jnp.float32) * 0.02,
    }
    return p


# -----------------------------------------------------------------------------
# Full TransformerBlock forward (Pallas kernels + reshape/transpose glue).
# -----------------------------------------------------------------------------
def transformer_block(x, params, n_heads):
    B, E, T, H, W, C = x.shape
    ca = C // n_heads
    D = T * H * W * ca
    N = B * E * T * H * W
    x2d = x.reshape(N, C)

    # LayerNorm + QKV (Pallas kernel 1)
    qkv = ln_qkv(x2d, params["in_ln_g"], params["in_ln_b"], params["w_qkv"])

    # einops: 'b e t h w (k n c) -> k b n e (t h w c)'   (XLA glue; the per-head
    # attention features fundamentally gather across spatial rows)
    qkv = qkv.reshape(B, E, T, H, W, 3, n_heads, ca)
    qkv = jnp.transpose(qkv, (5, 0, 6, 1, 2, 3, 4, 7)).reshape(3, B, n_heads, E, D)
    q, k, v = qkv[0], qkv[1], qkv[2]

    # cosine-LN + scale + attention over ensemble axis (Pallas kernel 2)
    attn = ens_attention_core(q, k, v, params["cos_ln_g"], params["cos_ln_b"],
                              params["scale"])

    # einops: 'b n e (t h w c) -> b e t h w (n c)'
    # TODO(synk): fold this HBM round trip into the attention kernel by doing
    # the (thw,ca)->(row,channel) relayout in VMEM and fusing the out-proj;
    # kept as an XLA transpose because the lane-splitting in-kernel reshape is
    # not reliably lowered by Mosaic for arbitrary shapes.
    attn = attn.reshape(B, n_heads, E, T, H, W, ca)
    attn = jnp.transpose(attn, (0, 2, 3, 4, 5, 1, 6)).reshape(N, C)

    # out-projection + residual + MLP block (Pallas kernel 3)
    out2d = out_proj_residual_mlp(x2d, attn, params)
    return out2d.reshape(B, E, T, H, W, C)


# -----------------------------------------------------------------------------
# Pure-JAX reference (mirrors the PyTorch forward) for verification.
# -----------------------------------------------------------------------------
def reference(x, params, n_heads):
    hp = lax.Precision.HIGHEST
    B, E, T, H, W, C = x.shape
    ca = C // n_heads
    D = T * H * W * ca
    xn = _layernorm(x, params["in_ln_g"].reshape(C), params["in_ln_b"].reshape(C))
    qkv = jnp.dot(xn, params["w_qkv"], precision=hp)
    qkv = qkv.reshape(B, E, T, H, W, 3, n_heads, ca)
    qkv = jnp.transpose(qkv, (5, 0, 6, 1, 2, 3, 4, 7)).reshape(3, B, n_heads, E, D)
    nqk = _layernorm(qkv[:2], params["cos_ln_g"].reshape(D), params["cos_ln_b"].reshape(D))
    scale = params["scale"][:, :, :1]           # (n_heads, 1, 1)
    sqk = nqk * scale
    q, k, v = sqk[0], sqk[1], qkv[2]
    scores = jnp.einsum("bned,bnmd->bnem", q, k, precision=hp)
    wts = jax.nn.softmax(scores, axis=-1)
    att = jnp.einsum("bnem,bnmd->bned", wts, v, precision=hp)
    att = att.reshape(B, n_heads, E, T, H, W, ca)
    att = jnp.transpose(att, (0, 2, 3, 4, 5, 1, 6)).reshape(B, E, T, H, W, C)
    y = x + jnp.dot(att, params["w_out"], precision=hp) + params["b_out"].reshape(C)
    yn = _layernorm(y, params["mlp_ln_g"].reshape(C), params["mlp_ln_b"].reshape(C))
    h = jnp.dot(yn, params["w_in"], precision=hp) + params["b_in"].reshape(-1)
    h = _gelu_exact(h)
    return y + jnp.dot(h, params["w_out2"], precision=hp) + params["b_out2"].reshape(C)


if __name__ == "__main__":
    # n_data_shape = (T, H, W, C); sequence axis of attention is the ensemble E.
    B, E, T, H, W, C = 2, 8, 2, 4, 4, 16
    n_heads, mlp_mult = 4, 2

    key = jax.random.PRNGKey(0)
    pkey, xkey = jax.random.split(key)
    params = init_params(pkey, (T, H, W, C), n_heads, mlp_mult)
    x = jax.random.normal(xkey, (B, E, T, H, W, C), jnp.float32)

    out = transformer_block(x, params, n_heads)
    out = jax.block_until_ready(out)

    ref = jax.block_until_ready(reference(x, params, n_heads))
    assert out.shape == (B, E, T, H, W, C)
    assert jnp.allclose(out, ref, rtol=1e-4, atol=1e-4), (
        float(jnp.max(jnp.abs(out - ref))))

    print("KERNEL_OK")
</pallas_src>

<mosaic_0001>
module attributes {stable_mosaic.version = 11 : i64} {
  func.func @_ln_qkv_kernel(%arg0: i32, %arg1: memref<512x16xf32, #tpu.memory_space<vmem>>, %arg2: memref<1x16xf32, #tpu.memory_space<vmem>>, %arg3: memref<1x16xf32, #tpu.memory_space<vmem>>, %arg4: memref<16x48xf32, #tpu.memory_space<vmem>>, %arg5: memref<512x48xf32, #tpu.memory_space<vmem>>) attributes {dimension_semantics = [#tpu.dimension_semantics<parallel>], iteration_bounds = array<i64: 1>, scalar_prefetch = 0 : i64, scratch_operands = 0 : i64, tpu.core_type = #tpu.core_type<tc>, window_params = [{transform_indices = @transform_0, window_bounds = array<i64: 512, 16>}, {pipeline_mode = #tpu.pipeline_mode<synchronous>, transform_indices = @transform_1, window_bounds = array<i64: 1, 16>}, {pipeline_mode = #tpu.pipeline_mode<synchronous>, transform_indices = @transform_2, window_bounds = array<i64: 1, 16>}, {pipeline_mode = #tpu.pipeline_mode<synchronous>, transform_indices = @transform_3, window_bounds = array<i64: 16, 48>}, {transform_indices = @transform_4, window_bounds = array<i64: 512, 48>}]} {
    %c0 = arith.constant 0 : index
    %c0_0 = arith.constant 0 : index
    %0 = vector.load %arg1[%c0, %c0_0] : memref<512x16xf32, #tpu.memory_space<vmem>>, vector<512x16xf32>
    %c0_1 = arith.constant 0 : index
    %c0_2 = arith.constant 0 : index
    %1 = vector.load %arg2[%c0_1, %c0_2] : memref<1x16xf32, #tpu.memory_space<vmem>>, vector<1x16xf32>
    %c0_3 = arith.constant 0 : index
    %c0_4 = arith.constant 0 : index
    %2 = vector.load %arg3[%c0_3, %c0_4] : memref<1x16xf32, #tpu.memory_space<vmem>>, vector<1x16xf32>
    %cst = arith.constant dense<0.000000e+00> : vector<512xf32>
    %3 = vector.multi_reduction <add>, %0, %cst [1] : vector<512x16xf32> to vector<512xf32>
    %4 = vector.shape_cast %3 : vector<512xf32> to vector<512x1xf32>
    %cst_5 = arith.constant 1.600000e+01 : f32
    %5 = vector.broadcast %cst_5 : f32 to vector<512x1xf32>
    %6 = arith.divf %4, %5 : vector<512x1xf32>
    %7 = vector.broadcast %6 : vector<512x1xf32> to vector<512x16xf32>
    %8 = arith.subf %0, %7 : vector<512x16xf32>
    %9 = arith.mulf %8, %8 : vector<512x16xf32>
    %cst_6 = arith.constant dense<0.000000e+00> : vector<512xf32>
    %10 = vector.multi_reduction <add>, %9, %cst_6 [1] : vector<512x16xf32> to vector<512xf32>
    %11 = vector.shape_cast %10 : vector<512xf32> to vector<512x1xf32>
    %cst_7 = arith.constant 1.600000e+01 : f32
    %12 = vector.broadcast %cst_7 : f32 to vector<512x1xf32>
    %13 = arith.divf %11, %12 : vector<512x1xf32>
    %14 = vector.broadcast %6 : vector<512x1xf32> to vector<512x16xf32>
    %15 = arith.subf %0, %14 : vector<512x16xf32>
    %cst_8 = arith.constant 9.99999974E-6 : f32
    %16 = vector.broadcast %cst_8 : f32 to vector<512x1xf32>
    %17 = arith.addf %13, %16 : vector<512x1xf32>
    %18 = math.rsqrt %17 : vector<512x1xf32>
    %19 = vector.broadcast %18 : vector<512x1xf32> to vector<512x16xf32>
    %20 = arith.mulf %15, %19 : vector<512x16xf32>
    %21 = vector.broadcast %1 : vector<1x16xf32> to vector<512x16xf32>
    %22 = arith.mulf %20, %21 : vector<512x16xf32>
    %23 = vector.broadcast %2 : vector<1x16xf32> to vector<512x16xf32>
    %24 = arith.addf %22, %23 : vector<512x16xf32>
    %c0_9 = arith.constant 0 : index
    %c0_10 = arith.constant 0 : index
    %25 = vector.load %arg4[%c0_9, %c0_10] : memref<16x48xf32, #tpu.memory_space<vmem>>, vector<16x48xf32>
    %cst_11 = arith.constant dense<0.000000e+00> : vector<512x48xf32>
    %26 = tpu.matmul %24, %25, %cst_11 {dimension_numbers = #tpu.dot_dimension_numbers<[1], [0], [0], [1], [0, 0, 1, 1], [], []>} : vector<512x16xf32>, vector<16x48xf32>, vector<512x48xf32> -> vector<512x48xf32>
    %c0_12 = arith.constant 0 : index
    %c0_13 = arith.constant 0 : index
    %27 = vector.load %arg5[%c0_12, %c0_13] : memref<512x48xf32, #tpu.memory_space<vmem>>, vector<512x48xf32>
    tpu.vector_store %arg5[%c0_12, %c0_13], %26 {strides = array<i32>} : memref<512x48xf32, #tpu.memory_space<vmem>>, vector<512x48xf32>,
    return
  }
  func.func @transform_0(%arg0: i32) -> (i32, i32) {
    %c0_i32 = arith.constant 0 : i32
    %c0_i32_0 = arith.constant 0 : i32
    return %arg0, %c0_i32 : i32, i32
  }
  func.func @transform_1(%arg0: i32) -> (i32, i32) {
    %c0_i32 = arith.constant 0 : i32
    %c0_i32_0 = arith.constant 0 : i32
    %c0_i32_1 = arith.constant 0 : i32
    return %c0_i32, %c0_i32_0 : i32, i32
  }
  func.func @transform_2(%arg0: i32) -> (i32, i32) {
    %c0_i32 = arith.constant 0 : i32
    %c0_i32_0 = arith.constant 0 : i32
    %c0_i32_1 = arith.constant 0 : i32
    return %c0_i32, %c0_i32_0 : i32, i32
  }
  func.func @transform_3(%arg0: i32) -> (i32, i32) {
    %c0_i32 = arith.constant 0 : i32
    %c0_i32_0 = arith.constant 0 : i32
    %c0_i32_1 = arith.constant 0 : i32
    return %c0_i32, %c0_i32_0 : i32, i32
  }
  func.func @transform_4(%arg0: i32) -> (i32, i32) {
    %c0_i32 = arith.constant 0 : i32
    %c0_i32_0 = arith.constant 0 : i32
    return %arg0, %c0_i32 : i32, i32
  }
}

</mosaic_0001>

<llo_original>
// kernel: tpu_custom_call.1
$region0: #{tpu_custom_call.1}
  #allocation0 [shape = 'u32[]', space=smem, size = 0x4, offset = 0x4, fixed_abs, tag = 'smem constant byte address 0x4 - core index']
  #allocation1 [shape = 'u32[72,128]{1,0:T(1,128)}', space=vmem, size = 0x9000, scoped, tag = 'internal scratch']
  %s0 = inlined_call_operand.vmem [shape: f32[512,16], index: 0, kind: input, shape index: {}]
  %s1 = inlined_call_operand.vmem [shape: f32[1,16], index: 1, kind: input, shape index: {}]
  %s2 = inlined_call_operand.vmem [shape: f32[1,16], index: 2, kind: input, shape index: {}]
  %s3 = inlined_call_operand.vmem [shape: f32[16,48], index: 3, kind: input, shape index: {}]
  %s4 = inlined_call_operand.vmem [shape: f32[512,48], index: 4, kind: output, shape index: {}]
  %s5 = sld [smem:[#allocation0]]
  $region26: #{tpu_custom_call.1} parent=0
    _
  %s7 = ssub.s32 1, %s5
  %s8 = scalar_select 0, %s7, %s5
  // Predicated region
  $region2: #{tpu_custom_call.1} parent=0 // pred_check
    _
  $region3: #{tpu_custom_call.1} parent=0 // pred_check_branch
    %10 = sbr.rel (0) target = $region5
  $region4: #{tpu_custom_call.1} parent=0 // pred_region
    _
  $region5: #{tpu_custom_call.1} parent=0 // pred_fallthru
    _
  // Predicated region
  $region6: #{tpu_custom_call.1} parent=0 // pred_check
    _
  $region7: #{tpu_custom_call.1} parent=0 // pred_check_branch
    %12 = sbr.rel (0) target = $region9
  $region8: #{tpu_custom_call.1} parent=0 // pred_region
    _
  $region9: #{tpu_custom_call.1} parent=0 // pred_fallthru
    _
  // Predicated region
  $region10: #{tpu_custom_call.1} parent=0 // pred_check
    _
  $region11: #{tpu_custom_call.1} parent=0 // pred_check_branch
    %14 = sbr.rel (0) target = $region13
  $region12: #{tpu_custom_call.1} parent=0 // pred_region
    _
  $region13: #{tpu_custom_call.1} parent=0 // pred_fallthru
    _
  // Predicated region
  $region14: #{tpu_custom_call.1} parent=0 // pred_check
    _
  $region15: #{tpu_custom_call.1} parent=0 // pred_check_branch
    %16 = sbr.rel (0) target = $region17
  $region16: #{tpu_custom_call.1} parent=0 // pred_region
    _
  $region17: #{tpu_custom_call.1} parent=0 // pred_fallthru
    _
  %v17 = vld [vmem:[%s0] sm:$0xff]
  %v18 = vld [vmem:[%s0 + $0x8] sm:$0xff]
  %v19 = vld [vmem:[%s0 + $0x10] sm:$0xff]
  %v20 = vld [vmem:[%s0 + $0x18] sm:$0xff]
  %v21 = vld [vmem:[%s0 + $0x20] sm:$0xff]
  %v22 = vld [vmem:[%s0 + $0x28] sm:$0xff]
  %v23 = vld [vmem:[%s0 + $0x30] sm:$0xff]
  %v24 = vld [vmem:[%s0 + $0x38] sm:$0xff]
  %v25 = vld [vmem:[%s0 + $0x40] sm:$0xff]
  %v26 = vld [vmem:[%s0 + $0x48] sm:$0xff]
  %v27 = vld [vmem:[%s0 + $0x50] sm:$0xff]
  %v28 = vld [vmem:[%s0 + $0x58] sm:$0xff]
  %v29 = vld [vmem:[%s0 + $0x60] sm:$0xff]
  %v30 = vld [vmem:[%s0 + $0x68] sm:$0xff]
  %v31 = vld [vmem:[%s0 + $0x70] sm:$0xff]
  %v32 = vld [vmem:[%s0 + $0x78] sm:$0xff]
  %v33 = vld [vmem:[%s0 + $0x80] sm:$0xff]
  %v34 = vld [vmem:[%s0 + $0x88] sm:$0xff]
  %v35 = vld [vmem:[%s0 + $0x90] sm:$0xff]
  %v36 = vld [vmem:[%s0 + $0x98] sm:$0xff]
  %v37 = vld [vmem:[%s0 + $0xa0] sm:$0xff]
  %v38 = vld [vmem:[%s0 + $0xa8] sm:$0xff]
  %v39 = vld [vmem:[%s0 + $0xb0] sm:$0xff]
  %v40 = vld [vmem:[%s0 + $0xb8] sm:$0xff]
  %v41 = vld [vmem:[%s0 + $0xc0] sm:$0xff]
  %v42 = vld [vmem:[%s0 + $0xc8] sm:$0xff]
  %v43 = vld [vmem:[%s0 + $0xd0] sm:$0xff]
  %v44 = vld [vmem:[%s0 + $0xd8] sm:$0xff]
  %v45 = vld [vmem:[%s0 + $0xe0] sm:$0xff]
  %v46 = vld [vmem:[%s0 + $0xe8] sm:$0xff]
  %v47 = vld [vmem:[%s0 + $0xf0] sm:$0xff]
  %v48 = vld [vmem:[%s0 + $0xf8] sm:$0xff]
  %v49 = vld [vmem:[%s0 + $0x100] sm:$0xff]
  %v50 = vld [vmem:[%s0 + $0x108] sm:$0xff]
  %v51 = vld [vmem:[%s0 + $0x110] sm:$0xff]
  %v52 = vld [vmem:[%s0 + $0x118] sm:$0xff]
  %v53 = vld [vmem:[%s0 + $0x120] sm:$0xff]
  %v54 = vld [vmem:[%s0 + $0x128] sm:$0xff]
  %v55 = vld [vmem:[%s0 + $0x130] sm:$0xff]
  %v56 = vld [vmem:[%s0 + $0x138] sm:$0xff]
  %v57 = vld [vmem:[%s0 + $0x140] sm:$0xff]
  %v58 = vld [vmem:[%s0 + $0x148] sm:$0xff]
  %v59 = vld [vmem:[%s0 + $0x150] sm:$0xff]
  %v60 = vld [vmem:[%s0 + $0x158] sm:$0xff]
  %v61 = vld [vmem:[%s0 + $0x160] sm:$0xff]
  %v62 = vld [vmem:[%s0 + $0x168] sm:$0xff]
  %v63 = vld [vmem:[%s0 + $0x170] sm:$0xff]
  %v64 = vld [vmem:[%s0 + $0x178] sm:$0xff]
  %v65 = vld [vmem:[%s0 + $0x180] sm:$0xff]
  %v66 = vld [vmem:[%s0 + $0x188] sm:$0xff]
  %v67 = vld [vmem:[%s0 + $0x190] sm:$0xff]
  %v68 = vld [vmem:[%s0 + $0x198] sm:$0xff]
  %v69 = vld [vmem:[%s0 + $0x1a0] sm:$0xff]
  %v70 = vld [vmem:[%s0 + $0x1a8] sm:$0xff]
  %v71 = vld [vmem:[%s0 + $0x1b0] sm:$0xff]
  %v72 = vld [vmem:[%s0 + $0x1b8] sm:$0xff]
  %v73 = vld [vmem:[%s0 + $0x1c0] sm:$0xff]
  %v74 = vld [vmem:[%s0 + $0x1c8] sm:$0xff]
  %v75 = vld [vmem:[%s0 + $0x1d0] sm:$0xff]
  %v76 = vld [vmem:[%s0 + $0x1d8] sm:$0xff]
  %v77 = vld [vmem:[%s0 + $0x1e0] sm:$0xff]
  %v78 = vld [vmem:[%s0 + $0x1e8] sm:$0xff]
  %v79 = vld [vmem:[%s0 + $0x1f0] sm:$0xff]
  %v80 = vld [vmem:[%s0 + $0x1f8] sm:$0xff]
  %v81 = vld [vmem:[%s1] sm:$0x1]
  %v82 = vld [vmem:[%s2] sm:$0x1]
  %vm83 = vcmask 130048
  %v84 = vsel %vm83, %v17, 0.0
  %85 = vadd.xlane.f32.xlu0 %v84
  %v86 = vpop.xlane.xlu0 %85
  %v87 = vsel %vm83, %v18, 0.0
  %88 = vadd.xlane.f32.xlu0 %v87
  %v89 = vpop.xlane.xlu0 %88
  %v90 = vsel %vm83, %v19, 0.0
  %91 = vadd.xlane.f32.xlu0 %v90
  %v92 = vpop.xlane.xlu0 %91
  %v93 = vsel %vm83, %v20, 0.0
  %94 = vadd.xlane.f32.xlu0 %v93
  %v95 = vpop.xlane.xlu0 %94
  %v96 = vsel %vm83, %v21, 0.0
  %97 = vadd.xlane.f32.xlu0 %v96
  %v98 = vpop.xlane.xlu0 %97
  %v99 = vsel %vm83, %v22, 0.0
  %100 = vadd.xlane.f32.xlu0 %v99
  %v101 = vpop.xlane.xlu0 %100
  %v102 = vsel %vm83, %v23, 0.0
  %103 = vadd.xlane.f32.xlu0 %v102
  %v104 = vpop.xlane.xlu0 %103
  %v105 = vsel %vm83, %v24, 0.0
  %106 = vadd.xlane.f32.xlu0 %v105
  %v107 = vpop.xlane.xlu0 %106
  %v108 = vsel %vm83, %v25, 0.0
  %109 = vadd.xlane.f32.xlu0 %v108
  %v110 = vpop.xlane.xlu0 %109
  %v111 = vsel %vm83, %v26, 0.0
  %112 = vadd.xlane.f32.xlu0 %v111
  %v113 = vpop.xlane.xlu0 %112
  %v114 = vsel %vm83, %v27, 0.0
  %115 = vadd.xlane.f32.xlu0 %v114
  %v116 = vpop.xlane.xlu0 %115
  %v117 = vsel %vm83, %v28, 0.0
  %118 = vadd.xlane.f32.xlu0 %v117
  %v119 = vpop.xlane.xlu0 %118
  %v120 = vsel %vm83, %v29, 0.0
  %121 = vadd.xlane.f32.xlu0 %v120
  %v122 = vpop.xlane.xlu0 %121
  %v123 = vsel %vm83, %v30, 0.0
  %124 = vadd.xlane.f32.xlu0 %v123
  %v125 = vpop.xlane.xlu0 %124
  %v126 = vsel %vm83, %v31, 0.0
  %127 = vadd.xlane.f32.xlu0 %v126
  %v128 = vpop.xlane.xlu0 %127
  %v129 = vsel %vm83, %v32, 0.0
  %130 = vadd.xlane.f32.xlu0 %v129
  %v131 = vpop.xlane.xlu0 %130
  %v132 = vsel %vm83, %v33, 0.0
  %133 = vadd.xlane.f32.xlu0 %v132
  %v134 = vpop.xlane.xlu0 %133
  %v135 = vsel %vm83, %v34, 0.0
  %136 = vadd.xlane.f32.xlu0 %v135
  %v137 = vpop.xlane.xlu0 %136
  %v138 = vsel %vm83, %v35, 0.0
  %139 = vadd.xlane.f32.xlu0 %v138
  %v140 = vpop.xlane.xlu0 %139
  %v141 = vsel %vm83, %v36, 0.0
  %142 = vadd.xlane.f32.xlu0 %v141
  %v143 = vpop.xlane.xlu0 %142
  %v144 = vsel %vm83, %v37, 0.0
  %145 = vadd.xlane.f32.xlu0 %v144
  %v146 = vpop.xlane.xlu0 %145
  %v147 = vsel %vm83, %v38, 0.0
  %148 = vadd.xlane.f32.xlu0 %v147
  %v149 = vpop.xlane.xlu0 %148
  %v150 = vsel %vm83, %v39, 0.0
  %151 = vadd.xlane.f32.xlu0 %v150
  %v152 = vpop.xlane.xlu0 %151
  %v153 = vsel %vm83, %v40, 0.0
  %154 = vadd.xlane.f32.xlu0 %v153
  %v155 = vpop.xlane.xlu0 %154
  %v156 = vsel %vm83, %v41, 0.0
  %157 = vadd.xlane.f32.xlu0 %v156
  %v158 = vpop.xlane.xlu0 %157
  %v159 = vsel %vm83, %v42, 0.0
  %160 = vadd.xlane.f32.xlu0 %v159
  %v161 = vpop.xlane.xlu0 %160
  %v162 = vsel %vm83, %v43, 0.0
  %163 = vadd.xlane.f32.xlu0 %v162
  %v164 = vpop.xlane.xlu0 %163
  %v165 = vsel %vm83, %v44, 0.0
  %166 = vadd.xlane.f32.xlu0 %v165
  %v167 = vpop.xlane.xlu0 %166
  %v168 = vsel %vm83, %v45, 0.0
  %169 = vadd.xlane.f32.xlu0 %v168
  %v170 = vpop.xlane.xlu0 %169
  %v171 = vsel %vm83, %v46, 0.0
  %172 = vadd.xlane.f32.xlu0 %v171
  %v173 = vpop.xlane.xlu0 %172
  %v174 = vsel %vm83, %v47, 0.0
  %175 = vadd.xlane.f32.xlu0 %v174
  %v176 = vpop.xlane.xlu0 %175
  %v177 = vsel %vm83, %v48, 0.0
  %178 = vadd.xlane.f32.xlu0 %v177
  %v179 = vpop.xlane.xlu0 %178
  %v180 = vsel %vm83, %v49, 0.0
  %181 = vadd.xlane.f32.xlu0 %v180
  %v182 = vpop.xlane.xlu0 %181
  %v183 = vsel %vm83, %v50, 0.0
  %184 = vadd.xlane.f32.xlu0 %v183
  %v185 = vpop.xlane.xlu0 %184
  %v186 = vsel %vm83, %v51, 0.0
  %187 = vadd.xlane.f32.xlu0 %v186
  %v188 = vpop.xlane.xlu0 %187
  %v189 = vsel %vm83, %v52, 0.0
  %190 = vadd.xlane.f32.xlu0 %v189
  %v191 = vpop.xlane.xlu0 %190
  %v192 = vsel %vm83, %v53, 0.0
  %193 = vadd.xlane.f32.xlu0 %v192
  %v194 = vpop.xlane.xlu0 %193
  %v195 = vsel %vm83, %v54, 0.0
  %196 = vadd.xlane.f32.xlu0 %v195
  %v197 = vpop.xlane.xlu0 %196
  %v198 = vsel %vm83, %v55, 0.0
  %199 = vadd.xlane.f32.xlu0 %v198
  %v200 = vpop.xlane.xlu0 %199
  %v201 = vsel %vm83, %v56, 0.0
  %202 = vadd.xlane.f32.xlu0 %v201
  %v203 = vpop.xlane.xlu0 %202
  %v204 = vsel %vm83, %v57, 0.0
  %205 = vadd.xlane.f32.xlu0 %v204
  %v206 = vpop.xlane.xlu0 %205
  %v207 = vsel %vm83, %v58, 0.0
  %208 = vadd.xlane.f32.xlu0 %v207
  %v209 = vpop.xlane.xlu0 %208
  %v210 = vsel %vm83, %v59, 0.0
  %211 = vadd.xlane.f32.xlu0 %v210
  %v212 = vpop.xlane.xlu0 %211
  %v213 = vsel %vm83, %v60, 0.0
  %214 = vadd.xlane.f32.xlu0 %v213
  %v215 = vpop.xlane.xlu0 %214
  %v216 = vsel %vm83, %v61, 0.0
  %217 = vadd.xlane.f32.xlu0 %v216
  %v218 = vpop.xlane.xlu0 %217
  %v219 = vsel %vm83, %v62, 0.0
  %220 = vadd.xlane.f32.xlu0 %v219
  %v221 = vpop.xlane.xlu0 %220
  %v222 = vsel %vm83, %v63, 0.0
  %223 = vadd.xlane.f32.xlu0 %v222
  %v224 = vpop.xlane.xlu0 %223
  %v225 = vsel %vm83, %v64, 0.0
  %226 = vadd.xlane.f32.xlu0 %v225
  %v227 = vpop.xlane.xlu0 %226
  %v228 = vsel %vm83, %v65, 0.0
  %229 = vadd.xlane.f32.xlu0 %v228
  %v230 = vpop.xlane.xlu0 %229
  %v231 = vsel %vm83, %v66, 0.0
  %232 = vadd.xlane.f32.xlu0 %v231
  %v233 = vpop.xlane.xlu0 %232
  %v234 = vsel %vm83, %v67, 0.0
  %235 = vadd.xlane.f32.xlu0 %v234
  %v236 = vpop.xlane.xlu0 %235
  %v237 = vsel %vm83, %v68, 0.0
  %238 = vadd.xlane.f32.xlu0 %v237
  %v239 = vpop.xlane.xlu0 %238
  %v240 = vsel %vm83, %v69, 0.0
  %241 = vadd.xlane.f32.xlu0 %v240
  %v242 = vpop.xlane.xlu0 %241
  %v243 = vsel %vm83, %v70, 0.0
  %244 = vadd.xlane.f32.xlu0 %v243
  %v245 = vpop.xlane.xlu0 %244
  %v246 = vsel %vm83, %v71, 0.0
  %247 = vadd.xlane.f32.xlu0 %v246
  %v248 = vpop.xlane.xlu0 %247
  %v249 = vsel %vm83, %v72, 0.0
  %250 = vadd.xlane.f32.xlu0 %v249
  %v251 = vpop.xlane.xlu0 %250
  %v252 = vsel %vm83, %v73, 0.0
  %253 = vadd.xlane.f32.xlu0 %v252
  %v254 = vpop.xlane.xlu0 %253
  %v255 = vsel %vm83, %v74, 0.0
  %256 = vadd.xlane.f32.xlu0 %v255
  %v257 = vpop.xlane.xlu0 %256
  %v258 = vsel %vm83, %v75, 0.0
  %259 = vadd.xlane.f32.xlu0 %v258
  %v260 = vpop.xlane.xlu0 %259
  %v261 = vsel %vm83, %v76, 0.0
  %262 = vadd.xlane.f32.xlu0 %v261
  %v263 = vpop.xlane.xlu0 %262
  %v264 = vsel %vm83, %v77, 0.0
  %265 = vadd.xlane.f32.xlu0 %v264
  %v266 = vpop.xlane.xlu0 %265
  %v267 = vsel %vm83, %v78, 0.0
  %268 = vadd.xlane.f32.xlu0 %v267
  %v269 = vpop.xlane.xlu0 %268
  %v270 = vsel %vm83, %v79, 0.0
  %271 = vadd.xlane.f32.xlu0 %v270
  %v272 = vpop.xlane.xlu0 %271
  %v273 = vsel %vm83, %v80, 0.0
  %274 = vadd.xlane.f32.xlu0 %v273
  %v275 = vpop.xlane.xlu0 %274
  %v276 = vrcp.pop 16.0
  %v277 = vmul.f32 16.0, %v276
  %v278 = vsub.f32 1.0, %v277
  %v279 = vmul.f32 %v276, %v278
  %v280 = vadd.f32 %v276, %v279
  %vm281 = vweird.f32 %v276
  %v282 = vsel %vm281, %v276, %v280
  %v283 = vmul.f32 %v86, %v282
  %v284 = vmul.f32 %v89, %v282
  %v285 = vmul.f32 %v92, %v282
  %v286 = vmul.f32 %v95, %v282
  %v287 = vmul.f32 %v98, %v282
  %v288 = vmul.f32 %v101, %v282
  %v289 = vmul.f32 %v104, %v282
  %v290 = vmul.f32 %v107, %v282
  %v291 = vmul.f32 %v110, %v282
  %v292 = vmul.f32 %v113, %v282
  %v293 = vmul.f32 %v116, %v282
  %v294 = vmul.f32 %v119, %v282
  %v295 = vmul.f32 %v122, %v282
  %v296 = vmul.f32 %v125, %v282
  %v297 = vmul.f32 %v128, %v282
  %v298 = vmul.f32 %v131, %v282
  %v299 = vmul.f32 %v134, %v282
  %v300 = vmul.f32 %v137, %v282
  %v301 = vmul.f32 %v140, %v282
  %v302 = vmul.f32 %v143, %v282
  %v303 = vmul.f32 %v146, %v282
  %v304 = vmul.f32 %v149, %v282
  %v305 = vmul.f32 %v152, %v282
  %v306 = vmul.f32 %v155, %v282
  %v307 = vmul.f32 %v158, %v282
  %v308 = vmul.f32 %v161, %v282
  %v309 = vmul.f32 %v164, %v282
  %v310 = vmul.f32 %v167, %v282
  %v311 = vmul.f32 %v170, %v282
  %v312 = vmul.f32 %v173, %v282
  %v313 = vmul.f32 %v176, %v282
  %v314 = vmul.f32 %v179, %v282
  %v315 = vmul.f32 %v182, %v282
  %v316 = vmul.f32 %v185, %v282
  %v317 = vmul.f32 %v188, %v282
  %v318 = vmul.f32 %v191, %v282
  %v319 = vmul.f32 %v194, %v282
  %v320 = vmul.f32 %v197, %v282
  %v321 = vmul.f32 %v200, %v282
  %v322 = vmul.f32 %v203, %v282
  %v323 = vmul.f32 %v206, %v282
  %v324 = vmul.f32 %v209, %v282
  %v325 = vmul.f32 %v212, %v282
  %v326 = vmul.f32 %v215, %v282
  %v327 = vmul.f32 %v218, %v282
  %v328 = vmul.f32 %v221, %v282
  %v329 = vmul.f32 %v224, %v282
  %v330 = vmul.f32 %v227, %v282
  %v331 = vmul.f32 %v230, %v282
  %v332 = vmul.f32 %v233, %v282
  %v333 = vmul.f32 %v236, %v282
  %v334 = vmul.f32 %v239, %v282
  %v335 = vmul.f32 %v242, %v282
  %v336 = vmul.f32 %v245, %v282
  %v337 = vmul.f32 %v248, %v282
  %v338 = vmul.f32 %v251, %v282
  %v339 = vmul.f32 %v254, %v282
  %v340 = vmul.f32 %v257, %v282
  %v341 = vmul.f32 %v260, %v282
  %v342 = vmul.f32 %v263, %v282
  %v343 = vmul.f32 %v266, %v282
  %v344 = vmul.f32 %v269, %v282
  %v345 = vmul.f32 %v272, %v282
  %v346 = vmul.f32 %v275, %v282
  %v347 = vsub.f32 %v17, %v283
  %v348 = vsub.f32 %v18, %v284
  %v349 = vsub.f32 %v19, %v285
  %v350 = vsub.f32 %v20, %v286
  %v351 = vsub.f32 %v21, %v287
  %v352 = vsub.f32 %v22, %v288
  %v353 = vsub.f32 %v23, %v289
  %v354 = vsub.f32 %v24, %v290
  %v355 = vsub.f32 %v25, %v291
  %v356 = vsub.f32 %v26, %v292
  %v357 = vsub.f32 %v27, %v293
  %v358 = vsub.f32 %v28, %v294
  %v359 = vsub.f32 %v29, %v295
  %v360 = vsub.f32 %v30, %v296
  %v361 = vsub.f32 %v31, %v297
  %v362 = vsub.f32 %v32, %v298
  %v363 = vsub.f32 %v33, %v299
  %v364 = vsub.f32 %v34, %v300
  %v365 = vsub.f32 %v35, %v301
  %v366 = vsub.f32 %v36, %v302
  %v367 = vsub.f32 %v37, %v303
  %v368 = vsub.f32 %v38, %v304
  %v369 = vsub.f32 %v39, %v305
  %v370 = vsub.f32 %v40, %v306
  %v371 = vsub.f32 %v41, %v307
  %v372 = vsub.f32 %v42, %v308
  %v373 = vsub.f32 %v43, %v309
  %v374 = vsub.f32 %v44, %v310
  %v375 = vsub.f32 %v45, %v311
  %v376 = vsub.f32 %v46, %v312
  %v377 = vsub.f32 %v47, %v313
  %v378 = vsub.f32 %v48, %v314
  %v379 = vsub.f32 %v49, %v315
  %v380 = vsub.f32 %v50, %v316
  %v381 = vsub.f32 %v51, %v317
  %v382 = vsub.f32 %v52, %v318
  %v383 = vsub.f32 %v53, %v319
  %v384 = vsub.f32 %v54, %v320
  %v385 = vsub.f32 %v55, %v321
  %v386 = vsub.f32 %v56, %v322
  %v387 = vsub.f32 %v57, %v323
  %v388 = vsub.f32 %v58, %v324
  %v389 = vsub.f32 %v59, %v325
  %v390 = vsub.f32 %v60, %v326
  %v391 = vsub.f32 %v61, %v327
  %v392 = vsub.f32 %v62, %v328
  %v393 = vsub.f32 %v63, %v329
  %v394 = vsub.f32 %v64, %v330
  %v395 = vsub.f32 %v65, %v331
  %v396 = vsub.f32 %v66, %v332
  %v397 = vsub.f32 %v67, %v333
  %v398 = vsub.f32 %v68, %v334
  %v399 = vsub.f32 %v69, %v335
  %v400 = vsub.f32 %v70, %v336
  %v401 = vsub.f32 %v71, %v337
  %v402 = vsub.f32 %v72, %v338
  %v403 = vsub.f32 %v73, %v339
  %v404 = vsub.f32 %v74, %v340
  %v405 = vsub.f32 %v75, %v341
  %v406 = vsub.f32 %v76, %v342
  %v407 = vsub.f32 %v77, %v343
  %v408 = vsub.f32 %v78, %v344
  %v409 = vsub.f32 %v79, %v345
  %v410 = vsub.f32 %v80, %v346
  %v411 = vmul.f32 %v347, %v347
  %v412 = vmul.f32 %v348, %v348
  %v413 = vmul.f32 %v349, %v349
  %v414 = vmul.f32 %v350, %v350
  %v415 = vmul.f32 %v351, %v351
  %v416 = vmul.f32 %v352, %v352
  %v417 = vmul.f32 %v353, %v353
  %v418 = vmul.f32 %v354, %v354
  %v419 = vmul.f32 %v355, %v355
  %v420 = vmul.f32 %v356, %v356
  %v421 = vmul.f32 %v357, %v357
  %v422 = vmul.f32 %v358, %v358
  %v423 = vmul.f32 %v359, %v359
  %v424 = vmul.f32 %v360, %v360
  %v425 = vmul.f32 %v361, %v361
  %v426 = vmul.f32 %v362, %v362
  %v427 = vmul.f32 %v363, %v363
  %v428 = vmul.f32 %v364, %v364
  %v429 = vmul.f32 %v365, %v365
  %v430 = vmul.f32 %v366, %v366
  %v431 = vmul.f32 %v367, %v367
  %v432 = vmul.f32 %v368, %v368
  %v433 = vmul.f32 %v369, %v369
  %v434 = vmul.f32 %v370, %v370
  %v435 = vmul.f32 %v371, %v371
  %v436 = vmul.f32 %v372, %v372
  %v437 = vmul.f32 %v373, %v373
  %v438 = vmul.f32 %v374, %v374
  %v439 = vmul.f32 %v375, %v375
  %v440 = vmul.f32 %v376, %v376
  %v441 = vmul.f32 %v377, %v377
  %v442 = vmul.f32 %v378, %v378
  %v443 = vmul.f32 %v379, %v379
  %v444 = vmul.f32 %v380, %v380
  %v445 = vmul.f32 %v381, %v381
  %v446 = vmul.f32 %v382, %v382
  %v447 = vmul.f32 %v383, %v383
  %v448 = vmul.f32 %v384, %v384
  %v449 = vmul.f32 %v385, %v385
  %v450 = vmul.f32 %v386, %v386
  %v451 = vmul.f32 %v387, %v387
  %v452 = vmul.f32 %v388, %v388
  %v453 = vmul.f32 %v389, %v389
  %v454 = vmul.f32 %v390, %v390
  %v455 = vmul.f32 %v391, %v391
  %v456 = vmul.f32 %v392, %v392
  %v457 = vmul.f32 %v393, %v393
  %v458 = vmul.f32 %v394, %v394
  %v459 = vmul.f32 %v395, %v395
  %v460 = vmul.f32 %v396, %v396
  %v461 = vmul.f32 %v397, %v397
  %v462 = vmul.f32 %v398, %v398
  %v463 = vmul.f32 %v399, %v399
  %v464 = vmul.f32 %v400, %v400
  %v465 = vmul.f32 %v401, %v401
  %v466 = vmul.f32 %v402, %v402
  %v467 = vmul.f32 %v403, %v403
  %v468 = vmul.f32 %v404, %v404
  %v469 = vmul.f32 %v405, %v405
  %v470 = vmul.f32 %v406, %v406
  %v471 = vmul.f32 %v407, %v407
  %v472 = vmul.f32 %v408, %v408
  %v473 = vmul.f32 %v409, %v409
  %v474 = vmul.f32 %v410, %v410
  %v475 = vsel %vm83, %v411, 0.0
  %476 = vadd.xlane.f32.xlu0 %v475
  %v477 = vpop.xlane.xlu0 %476
  %v478 = vsel %vm83, %v412, 0.0
  %479 = vadd.xlane.f32.xlu0 %v478
  %v480 = vpop.xlane.xlu0 %479
  %v481 = vsel %vm83, %v413, 0.0
  %482 = vadd.xlane.f32.xlu0 %v481
  %v483 = vpop.xlane.xlu0 %482
  %v484 = vsel %vm83, %v414, 0.0
  %485 = vadd.xlane.f32.xlu0 %v484
  %v486 = vpop.xlane.xlu0 %485
  %v487 = vsel %vm83, %v415, 0.0
  %488 = vadd.xlane.f32.xlu0 %v487
  %v489 = vpop.xlane.xlu0 %488
  %v490 = vsel %vm83, %v416, 0.0
  %491 = vadd.xlane.f32.xlu0 %v490
  %v492 = vpop.xlane.xlu0 %491
  %v493 = vsel %vm83, %v417, 0.0
  %494 = vadd.xlane.f32.xlu0 %v493
  %v495 = vpop.xlane.xlu0 %494
  %v496 = vsel %vm83, %v418, 0.0
  %497 = vadd.xlane.f32.xlu0 %v496
  %v498 = vpop.xlane.xlu0 %497
  %v499 = vsel %vm83, %v419, 0.0
  %500 = vadd.xlane.f32.xlu0 %v499
  %v501 = vpop.xlane.xlu0 %500
  %v502 = vsel %vm83, %v420, 0.0
  %503 = vadd.xlane.f32.xlu0 %v502
  %v504 = vpop.xlane.xlu0 %503
  %v505 = vsel %vm83, %v421, 0.0
  %506 = vadd.xlane.f32.xlu0 %v505
  %v507 = vpop.xlane.xlu0 %506
  %v508 = vsel %vm83, %v422, 0.0
  %509 = vadd.xlane.f32.xlu0 %v508
  %v510 = vpop.xlane.xlu0 %509
  %v511 = vsel %vm83, %v423, 0.0
  %512 = vadd.xlane.f32.xlu0 %v511
  %v513 = vpop.xlane.xlu0 %512
  %v514 = vsel %vm83, %v424, 0.0
  %515 = vadd.xlane.f32.xlu0 %v514
  %v516 = vpop.xlane.xlu0 %515
  %v517 = vsel %vm83, %v425, 0.0
  %518 = vadd.xlane.f32.xlu0 %v517
  %v519 = vpop.xlane.xlu0 %518
  %v520 = vsel %vm83, %v426, 0.0
  %521 = vadd.xlane.f32.xlu0 %v520
  %v522 = vpop.xlane.xlu0 %521
  %v523 = vsel %vm83, %v427, 0.0
  %524 = vadd.xlane.f32.xlu0 %v523
  %v525 = vpop.xlane.xlu0 %524
  %v526 = vsel %vm83, %v428, 0.0
  %527 = vadd.xlane.f32.xlu0 %v526
  %v528 = vpop.xlane.xlu0 %527
  %v529 = vsel %vm83, %v429, 0.0
  %530 = vadd.xlane.f32.xlu0 %v529
  %v531 = vpop.xlane.xlu0 %530
  %v532 = vsel %vm83, %v430, 0.0
  %533 = vadd.xlane.f32.xlu0 %v532
  %v534 = vpop.xlane.xlu0 %533
  %v535 = vsel %vm83, %v431, 0.0
  %536 = vadd.xlane.f32.xlu0 %v535
  %v537 = vpop.xlane.xlu0 %536
  %v538 = vsel %vm83, %v432, 0.0
  %539 = vadd.xlane.f32.xlu0 %v538
  %v540 = vpop.xlane.xlu0 %539
  %v541 = vsel %vm83, %v433, 0.0
  %542 = vadd.xlane.f32.xlu0 %v541
  %v543 = vpop.xlane.xlu0 %542
  %v544 = vsel %vm83, %v434, 0.0
  %545 = vadd.xlane.f32.xlu0 %v544
  %v546 = vpop.xlane.xlu0 %545
  %v547 = vsel %vm83, %v435, 0.0
  %548 = vadd.xlane.f32.xlu0 %v547
  %v549 = vpop.xlane.xlu0 %548
  %v550 = vsel %vm83, %v436, 0.0
  %551 = vadd.xlane.f32.xlu0 %v550
  %v552 = vpop.xlane.xlu0 %551
  %v553 = vsel %vm83, %v437, 0.0
  %554 = vadd.xlane.f32.xlu0 %v553
  %v555 = vpop.xlane.xlu0 %554
  %v556 = vsel %vm83, %v438, 0.0
  %557 = vadd.xlane.f32.xlu0 %v556
  %v558 = vpop.xlane.xlu0 %557
  %v559 = vsel %vm83, %v439, 0.0
  %560 = vadd.xlane.f32.xlu0 %v559
  %v561 = vpop.xlane.xlu0 %560
  %v562 = vsel %vm83, %v440, 0.0
  %563 = vadd.xlane.f32.xlu0 %v562
  %v564 = vpop.xlane.xlu0 %563
  %v565 = vsel %vm83, %v441, 0.0
  %566 = vadd.xlane.f32.xlu0 %v565
  %v567 = vpop.xlane.xlu0 %566
  %v568 = vsel %vm83, %v442, 0.0
  %569 = vadd.xlane.f32.xlu0 %v568
  %v570 = vpop.xlane.xlu0 %569
  %v571 = vsel %vm83, %v443, 0.0
  %572 = vadd.xlane.f32.xlu0 %v571
  %v573 = vpop.xlane.xlu0 %572
  %v574 = vsel %vm83, %v444, 0.0
  %575 = vadd.xlane.f32.xlu0 %v574
  %v576 = vpop.xlane.xlu0 %575
  %v577 = vsel %vm83, %v445, 0.0
  %578 = vadd.xlane.f32.xlu0 %v577
  %v579 = vpop.xlane.xlu0 %578
  %v580 = vsel %vm83, %v446, 0.0
  %581 = vadd.xlane.f32.xlu0 %v580
  %v582 = vpop.xlane.xlu0 %581
  %v583 = vsel %vm83, %v447, 0.0
  %584 = vadd.xlane.f32.xlu0 %v583
  %v585 = vpop.xlane.xlu0 %584
  %v586 = vsel %vm83, %v448, 0.0
  %587 = vadd.xlane.f32.xlu0 %v586
  %v588 = vpop.xlane.xlu0 %587
  %v589 = vsel %vm83, %v449, 0.0
  %590 = vadd.xlane.f32.xlu0 %v589
  %v591 = vpop.xlane.xlu0 %590
  %v592 = vsel %vm83, %v450, 0.0
  %593 = vadd.xlane.f32.xlu0 %v592
  %v594 = vpop.xlane.xlu0 %593
  %v595 = vsel %vm83, %v451, 0.0
  %596 = vadd.xlane.f32.xlu0 %v595
  %v597 = vpop.xlane.xlu0 %596
  %v598 = vsel %vm83, %v452, 0.0
  %599 = vadd.xlane.f32.xlu0 %v598
  %v600 = vpop.xlane.xlu0 %599
  %v601 = vsel %vm83, %v453, 0.0
  %602 = vadd.xlane.f32.xlu0 %v601
  %v603 = vpop.xlane.xlu0 %602
  %v604 = vsel %vm83, %v454, 0.0
  %605 = vadd.xlane.f32.xlu0 %v604
  %v606 = vpop.xlane.xlu0 %605
  %v607 = vsel %vm83, %v455, 0.0
  %608 = vadd.xlane.f32.xlu0 %v607
  %v609 = vpop.xlane.xlu0 %608
  %v610 = vsel %vm83, %v456, 0.0
  %611 = vadd.xlane.f32.xlu0 %v610
  %v612 = vpop.xlane.xlu0 %611
  %v613 = vsel %vm83, %v457, 0.0
  %614 = vadd.xlane.f32.xlu0 %v613
  %v615 = vpop.xlane.xlu0 %614
  %v616 = vsel %vm83, %v458, 0.0
  %617 = vadd.xlane.f32.xlu0 %v616
  %v618 = vpop.xlane.xlu0 %617
  %v619 = vsel %vm83, %v459, 0.0
  %620 = vadd.xlane.f32.xlu0 %v619
  %v621 = vpop.xlane.xlu0 %620
  %v622 = vsel %vm83, %v460, 0.0
  %623 = vadd.xlane.f32.xlu0 %v622
  %v624 = vpop.xlane.xlu0 %623
  %v625 = vsel %vm83, %v461, 0.0
  %626 = vadd.xlane.f32.xlu0 %v625
  %v627 = vpop.xlane.xlu0 %626
  %v628 = vsel %vm83, %v462, 0.0
  %629 = vadd.xlane.f32.xlu0 %v628
  %v630 = vpop.xlane.xlu0 %629
  %v631 = vsel %vm83, %v463, 0.0
  %632 = vadd.xlane.f32.xlu0 %v631
  %v633 = vpop.xlane.xlu0 %632
  %v634 = vsel %vm83, %v464, 0.0
  %635 = vadd.xlane.f32.xlu0 %v634
  %v636 = vpop.xlane.xlu0 %635
  %v637 = vsel %vm83, %v465, 0.0
  %638 = vadd.xlane.f32.xlu0 %v637
  %v639 = vpop.xlane.xlu0 %638
  %v640 = vsel %vm83, %v466, 0.0
  %641 = vadd.xlane.f32.xlu0 %v640
  %v642 = vpop.xlane.xlu0 %641
  %v643 = vsel %vm83, %v467, 0.0
  %644 = vadd.xlane.f32.xlu0 %v643
  %v645 = vpop.xlane.xlu0 %644
  %v646 = vsel %vm83, %v468, 0.0
  %647 = vadd.xlane.f32.xlu0 %v646
  %v648 = vpop.xlane.xlu0 %647
  %v649 = vsel %vm83, %v469, 0.0
  %650 = vadd.xlane.f32.xlu0 %v649
  %v651 = vpop.xlane.xlu0 %650
  %v652 = vsel %vm83, %v470, 0.0
  %653 = vadd.xlane.f32.xlu0 %v652
  %v654 = vpop.xlane.xlu0 %653
  %v655 = vsel %vm83, %v471, 0.0
  %656 = vadd.xlane.f32.xlu0 %v655
  %v657 = vpop.xlane.xlu0 %656
  %v658 = vsel %vm83, %v472, 0.0
  %659 = vadd.xlane.f32.xlu0 %v658
  %v660 = vpop.xlane.xlu0 %659
  %v661 = vsel %vm83, %v473, 0.0
  %662 = vadd.xlane.f32.xlu0 %v661
  %v663 = vpop.xlane.xlu0 %662
  %v664 = vsel %vm83, %v474, 0.0
  %665 = vadd.xlane.f32.xlu0 %v664
  %v666 = vpop.xlane.xlu0 %665
  %v667 = vmul.f32 %v477, %v282
  %v668 = vmul.f32 %v480, %v282
  %v669 = vmul.f32 %v483, %v282
  %v670 = vmul.f32 %v486, %v282
  %v671 = vmul.f32 %v489, %v282
  %v672 = vmul.f32 %v492, %v282
  %v673 = vmul.f32 %v495, %v282
  %v674 = vmul.f32 %v498, %v282
  %v675 = vmul.f32 %v501, %v282
  %v676 = vmul.f32 %v504, %v282
  %v677 = vmul.f32 %v507, %v282
  %v678 = vmul.f32 %v510, %v282
  %v679 = vmul.f32 %v513, %v282
  %v680 = vmul.f32 %v516, %v282
  %v681 = vmul.f32 %v519, %v282
  %v682 = vmul.f32 %v522, %v282
  %v683 = vmul.f32 %v525, %v282
  %v684 = vmul.f32 %v528, %v282
  %v685 = vmul.f32 %v531, %v282
  %v686 = vmul.f32 %v534, %v282
  %v687 = vmul.f32 %v537, %v282
  %v688 = vmul.f32 %v540, %v282
  %v689 = vmul.f32 %v543, %v282
  %v690 = vmul.f32 %v546, %v282
  %v691 = vmul.f32 %v549, %v282
  %v692 = vmul.f32 %v552, %v282
  %v693 = vmul.f32 %v555, %v282
  %v694 = vmul.f32 %v558, %v282
  %v695 = vmul.f32 %v561, %v282
  %v696 = vmul.f32 %v564, %v282
  %v697 = vmul.f32 %v567, %v282
  %v698 = vmul.f32 %v570, %v282
  %v699 = vmul.f32 %v573, %v282
  %v700 = vmul.f32 %v576, %v282
  %v701 = vmul.f32 %v579, %v282
  %v702 = vmul.f32 %v582, %v282
  %v703 = vmul.f32 %v585, %v282
  %v704 = vmul.f32 %v588, %v282
  %v705 = vmul.f32 %v591, %v282
  %v706 = vmul.f32 %v594, %v282
  %v707 = vmul.f32 %v597, %v282
  %v708 = vmul.f32 %v600, %v282
  %v709 = vmul.f32 %v603, %v282
  %v710 = vmul.f32 %v606, %v282
  %v711 = vmul.f32 %v609, %v282
  %v712 = vmul.f32 %v612, %v282
  %v713 = vmul.f32 %v615, %v282
  %v714 = vmul.f32 %v618, %v282
  %v715 = vmul.f32 %v621, %v282
  %v716 = vmul.f32 %v624, %v282
  %v717 = vmul.f32 %v627, %v282
  %v718 = vmul.f32 %v630, %v282
  %v719 = vmul.f32 %v633, %v282
  %v720 = vmul.f32 %v636, %v282
  %v721 = vmul.f32 %v639, %v282
  %v722 = vmul.f32 %v642, %v282
  %v723 = vmul.f32 %v645, %v282
  %v724 = vmul.f32 %v648, %v282
  %v725 = vmul.f32 %v651, %v282
  %v726 = vmul.f32 %v654, %v282
  %v727 = vmul.f32 %v657, %v282
  %v728 = vmul.f32 %v660, %v282
  %v729 = vmul.f32 %v663, %v282
  %v730 = vmul.f32 %v666, %v282
  %v731 = vadd.f32 %v667, 1e-05
  %v732 = vadd.f32 %v668, 1e-05
  %v733 = vadd.f32 %v669, 1e-05
  %v734 = vadd.f32 %v670, 1e-05
  %v735 = vadd.f32 %v671, 1e-05
  %v736 = vadd.f32 %v672, 1e-05
  %v737 = vadd.f32 %v673, 1e-05
  %v738 = vadd.f32 %v674, 1e-05
  %v739 = vadd.f32 %v675, 1e-05
  %v740 = vadd.f32 %v676, 1e-05
  %v741 = vadd.f32 %v677, 1e-05
  %v742 = vadd.f32 %v678, 1e-05
  %v743 = vadd.f32 %v679, 1e-05
  %v744 = vadd.f32 %v680, 1e-05
  %v745 = vadd.f32 %v681, 1e-05
  %v746 = vadd.f32 %v682, 1e-05
  %v747 = vadd.f32 %v683, 1e-05
  %v748 = vadd.f32 %v684, 1e-05
  %v749 = vadd.f32 %v685, 1e-05
  %v750 = vadd.f32 %v686, 1e-05
  %v751 = vadd.f32 %v687, 1e-05
  %v752 = vadd.f32 %v688, 1e-05
  %v753 = vadd.f32 %v689, 1e-05
  %v754 = vadd.f32 %v690, 1e-05
  %v755 = vadd.f32 %v691, 1e-05
  %v756 = vadd.f32 %v692, 1e-05
  %v757 = vadd.f32 %v693, 1e-05
  %v758 = vadd.f32 %v694, 1e-05
  %v759 = vadd.f32 %v695, 1e-05
  %v760 = vadd.f32 %v696, 1e-05
  %v761 = vadd.f32 %v697, 1e-05
  %v762 = vadd.f32 %v698, 1e-05
  %v763 = vadd.f32 %v699, 1e-05
  %v764 = vadd.f32 %v700, 1e-05
  %v765 = vadd.f32 %v701, 1e-05
  %v766 = vadd.f32 %v702, 1e-05
  %v767 = vadd.f32 %v703, 1e-05
  %v768 = vadd.f32 %v704, 1e-05
  %v769 = vadd.f32 %v705, 1e-05
  %v770 = vadd.f32 %v706, 1e-05
  %v771 = vadd.f32 %v707, 1e-05
  %v772 = vadd.f32 %v708, 1e-05
  %v773 = vadd.f32 %v709, 1e-05
  %v774 = vadd.f32 %v710, 1e-05
  %v775 = vadd.f32 %v711, 1e-05
  %v776 = vadd.f32 %v712, 1e-05
  %v777 = vadd.f32 %v713, 1e-05
  %v778 = vadd.f32 %v714, 1e-05
  %v779 = vadd.f32 %v715, 1e-05
  %v780 = vadd.f32 %v716, 1e-05
  %v781 = vadd.f32 %v717, 1e-05
  %v782 = vadd.f32 %v718, 1e-05
  %v783 = vadd.f32 %v719, 1e-05
  %v784 = vadd.f32 %v720, 1e-05
  %v785 = vadd.f32 %v721, 1e-05
  %v786 = vadd.f32 %v722, 1e-05
  %v787 = vadd.f32 %v723, 1e-05
  %v788 = vadd.f32 %v724, 1e-05
  %v789 = vadd.f32 %v725, 1e-05
  %v790 = vadd.f32 %v726, 1e-05
  %v791 = vadd.f32 %v727, 1e-05
  %v792 = vadd.f32 %v728, 1e-05
  %v793 = vadd.f32 %v729, 1e-05
  %v794 = vadd.f32 %v730, 1e-05
  %v795 = vrsqrt.pop %v731
  %v796 = vmul.f32 %v795, %v731
  %v797 = vmul.f32 %v796, %v795
  %v798 = vmul.f32 0.5, %v797
  %v799 = vsub.f32 1.5, %v798
  %v800 = vmul.f32 %v795, %v799
  %vm801 = vweird.f32 %v731
  %vm802 = vweird.f32 %v795
  %vm803 = vmor %vm801, %vm802
  %v804 = vsel %vm803, %v795, %v800
  %v805 = vrsqrt.pop %v732
  %v806 = vmul.f32 %v805, %v732
  %v807 = vmul.f32 %v806, %v805
  %v808 = vmul.f32 0.5, %v807
  %v809 = vsub.f32 1.5, %v808
  %v810 = vmul.f32 %v805, %v809
  %vm811 = vweird.f32 %v732
  %vm812 = vweird.f32 %v805
  %vm813 = vmor %vm811, %vm812
  %v814 = vsel %vm813, %v805, %v810
  %v815 = vrsqrt.pop %v733
  %v816 = vmul.f32 %v815, %v733
  %v817 = vmul.f32 %v816, %v815
  %v818 = vmul.f32 0.5, %v817
  %v819 = vsub.f32 1.5, %v818
  %v820 = vmul.f32 %v815, %v819
  %vm821 = vweird.f32 %v733
  %vm822 = vweird.f32 %v815
  %vm823 = vmor %vm821, %vm822
  %v824 = vsel %vm823, %v815, %v820
  %v825 = vrsqrt.pop %v734
  %v826 = vmul.f32 %v825, %v734
  %v827 = vmul.f32 %v826, %v825
  %v828 = vmul.f32 0.5, %v827
  %v829 = vsub.f32 1.5, %v828
  %v830 = vmul.f32 %v825, %v829
  %vm831 = vweird.f32 %v734
  %vm832 = vweird.f32 %v825
  %vm833 = vmor %vm831, %vm832
  %v834 = vsel %vm833, %v825, %v830
  %v835 = vrsqrt.pop %v735
  %v836 = vmul.f32 %v835, %v735
  %v837 = vmul.f32 %v836, %v835
  %v838 = vmul.f32 0.5, %v837
  %v839 = vsub.f32 1.5, %v838
  %v840 = vmul.f32 %v835, %v839
  %vm841 = vweird.f32 %v735
  %vm842 = vweird.f32 %v835
  %vm843 = vmor %vm841, %vm842
  %v844 = vsel %vm843, %v835, %v840
  %v845 = vrsqrt.pop %v736
  %v846 = vmul.f32 %v845, %v736
  %v847 = vmul.f32 %v846, %v845
  %v848 = vmul.f32 0.5, %v847
  %v849 = vsub.f32 1.5, %v848
  %v850 = vmul.f32 %v845, %v849
  %vm851 = vweird.f32 %v736
  %vm852 = vweird.f32 %v845
  %vm853 = vmor %vm851, %vm852
  %v854 = vsel %vm853, %v845, %v850
  %v855 = vrsqrt.pop %v737
  %v856 = vmul.f32 %v855, %v737
  %v857 = vmul.f32 %v856, %v855
  %v858 = vmul.f32 0.5, %v857
  %v859 = vsub.f32 1.5, %v858
  %v860 = vmul.f32 %v855, %v859
  %vm861 = vweird.f32 %v737
  %vm862 = vweird.f32 %v855
  %vm863 = vmor %vm861, %vm862
  %v864 = vsel %vm863, %v855, %v860
  %v865 = vrsqrt.pop %v738
  %v866 = vmul.f32 %v865, %v738
  %v867 = vmul.f32 %v866, %v865
  %v868 = vmul.f32 0.5, %v867
  %v869 = vsub.f32 1.5, %v868
  %v870 = vmul.f32 %v865, %v869
  %vm871 = vweird.f32 %v738
  %vm872 = vweird.f32 %v865
  %vm873 = vmor %vm871, %vm872
  %v874 = vsel %vm873, %v865, %v870
  %v875 = vrsqrt.pop %v739
  %v876 = vmul.f32 %v875, %v739
  %v877 = vmul.f32 %v876, %v875
  %v878 = vmul.f32 0.5, %v877
  %v879 = vsub.f32 1.5, %v878
  %v880 = vmul.f32 %v875, %v879
  %vm881 = vweird.f32 %v739
  %vm882 = vweird.f32 %v875
  %vm883 = vmor %vm881, %vm882
  %v884 = vsel %vm883, %v875, %v880
  %v885 = vrsqrt.pop %v740
  %v886 = vmul.f32 %v885, %v740
  %v887 = vmul.f32 %v886, %v885
  %v888 = vmul.f32 0.5, %v887
  %v889 = vsub.f32 1.5, %v888
  %v890 = vmul.f32 %v885, %v889
  %vm891 = vweird.f32 %v740
  %vm892 = vweird.f32 %v885
  %vm893 = vmor %vm891, %vm892
  %v894 = vsel %vm893, %v885, %v890
  %v895 = vrsqrt.pop %v741
  %v896 = vmul.f32 %v895, %v741
  %v897 = vmul.f32 %v896, %v895
  %v898 = vmul.f32 0.5, %v897
  %v899 = vsub.f32 1.5, %v898
  %v900 = vmul.f32 %v895, %v899
  %vm901 = vweird.f32 %v741
  %vm902 = vweird.f32 %v895
  %vm903 = vmor %vm901, %vm902
  %v904 = vsel %vm903, %v895, %v900
  %v905 = vrsqrt.pop %v742
  %v906 = vmul.f32 %v905, %v742
  %v907 = vmul.f32 %v906, %v905
  %v908 = vmul.f32 0.5, %v907
  %v909 = vsub.f32 1.5, %v908
  %v910 = vmul.f32 %v905, %v909
  %vm911 = vweird.f32 %v742
  %vm912 = vweird.f32 %v905
  %vm913 = vmor %vm911, %vm912
  %v914 = vsel %vm913, %v905, %v910
  %v915 = vrsqrt.pop %v743
  %v916 = vmul.f32 %v915, %v743
  %v917 = vmul.f32 %v916, %v915
  %v918 = vmul.f32 0.5, %v917
  %v919 = vsub.f32 1.5, %v918
  %v920 = vmul.f32 %v915, %v919
  %vm921 = vweird.f32 %v743
  %vm922 = vweird.f32 %v915
  %vm923 = vmor %vm921, %vm922
  %v924 = vsel %vm923, %v915, %v920
  %v925 = vrsqrt.pop %v744
  %v926 = vmul.f32 %v925, %v744
  %v927 = vmul.f32 %v926, %v925
  %v928 = vmul.f32 0.5, %v927
  %v929 = vsub.f32 1.5, %v928
  %v930 = vmul.f32 %v925, %v929
  %vm931 = vweird.f32 %v744
  %vm932 = vweird.f32 %v925
  %vm933 = vmor %vm931, %vm932
  %v934 = vsel %vm933, %v925, %v930
  %v935 = vrsqrt.pop %v745
  %v936 = vmul.f32 %v935, %v745
  %v937 = vmul.f32 %v936, %v935
  %v938 = vmul.f32 0.5, %v937
  %v939 = vsub.f32 1.5, %v938
  %v940 = vmul.f32 %v935, %v939
  %vm941 = vweird.f32 %v745
  %vm942 = vweird.f32 %v935
  %vm943 = vmor %vm941, %vm942
  %v944 = vsel %vm943, %v935, %v940
  %v945 = vrsqrt.pop %v746
  %v946 = vmul.f32 %v945, %v746
  %v947 = vmul.f32 %v946, %v945
  %v948 = vmul.f32 0.5, %v947
  %v949 = vsub.f32 1.5, %v948
  %v950 = vmul.f32 %v945, %v949
  %vm951 = vweird.f32 %v746
  %vm952 = vweird.f32 %v945
  %vm953 = vmor %vm951, %vm952
  %v954 = vsel %vm953, %v945, %v950
  %v955 = vrsqrt.pop %v747
  %v956 = vmul.f32 %v955, %v747
  %v957 = vmul.f32 %v956, %v955
  %v958 = vmul.f32 0.5, %v957
  %v959 = vsub.f32 1.5, %v958
  %v960 = vmul.f32 %v955, %v959
  %vm961 = vweird.f32 %v747
  %vm962 = vweird.f32 %v955
  %vm963 = vmor %vm961, %vm962
  %v964 = vsel %vm963, %v955, %v960
  %v965 = vrsqrt.pop %v748
  %v966 = vmul.f32 %v965, %v748
  %v967 = vmul.f32 %v966, %v965
  %v968 = vmul.f32 0.5, %v967
  %v969 = vsub.f32 1.5, %v968
  %v970 = vmul.f32 %v965, %v969
  %vm971 = vweird.f32 %v748
  %vm972 = vweird.f32 %v965
  %vm973 = vmor %vm971, %vm972
  %v974 = vsel %vm973, %v965, %v970
  %v975 = vrsqrt.pop %v749
  %v976 = vmul.f32 %v975, %v749
  %v977 = vmul.f32 %v976, %v975
  %v978 = vmul.f32 0.5, %v977
  %v979 = vsub.f32 1.5, %v978
  %v980 = vmul.f32 %v975, %v979
  %vm981 = vweird.f32 %v749
  %vm982 = vweird.f32 %v975
  %vm983 = vmor %vm981, %vm982
  %v984 = vsel %vm983, %v975, %v980
  %v985 = vrsqrt.pop %v750
  %v986 = vmul.f32 %v985, %v750
  %v987 = vmul.f32 %v986, %v985
  %v988 = vmul.f32 0.5, %v987
  %v989 = vsub.f32 1.5, %v988
  %v990 = vmul.f32 %v985, %v989
  %vm991 = vweird.f32 %v750
  %vm992 = vweird.f32 %v985
  %vm993 = vmor %vm991, %vm992
  %v994 = vsel %vm993, %v985, %v990
  %v995 = vrsqrt.pop %v751
  %v996 = vmul.f32 %v995, %v751
  %v997 = vmul.f32 %v996, %v995
  %v998 = vmul.f32 0.5, %v997
  %v999 = vsub.f32 1.5, %v998
  %v1000 = vmul.f32 %v995, %v999
  %vm1001 = vweird.f32 %v751
  %vm1002 = vweird.f32 %v995
  %vm1003 = vmor %vm1001, %vm1002
  %v1004 = vsel %vm1003, %v995, %v1000
  %v1005 = vrsqrt.pop %v752
  %v1006 = vmul.f32 %v1005, %v752
  %v1007 = vmul.f32 %v1006, %v1005
  %v1008 = vmul.f32 0.5, %v1007
  %v1009 = vsub.f32 1.5, %v1008
  %v1010 = vmul.f32 %v1005, %v1009
  %vm1011 = vweird.f32 %v752
  %vm1012 = vweird.f32 %v1005
  %vm1013 = vmor %vm1011, %vm1012
  %v1014 = vsel %vm1013, %v1005, %v1010
  %v1015 = vrsqrt.pop %v753
  %v1016 = vmul.f32 %v1015, %v753
  %v1017 = vmul.f32 %v1016, %v1015
  %v1018 = vmul.f32 0.5, %v1017
  %v1019 = vsub.f32 1.5, %v1018
  %v1020 = vmul.f32 %v1015, %v1019
  %vm1021 = vweird.f32 %v753
  %vm1022 = vweird.f32 %v1015
  %vm1023 = vmor %vm1021, %vm1022
  %v1024 = vsel %vm1023, %v1015, %v1020
  %v1025 = vrsqrt.pop %v754
  %v1026 = vmul.f32 %v1025, %v754
  %v1027 = vmul.f32 %v1026, %v1025
  %v1028 = vmul.f32 0.5, %v1027
  %v1029 = vsub.f32 1.5, %v1028
  %v1030 = vmul.f32 %v1025, %v1029
  %vm1031 = vweird.f32 %v754
  %vm1032 = vweird.f32 %v1025
  %vm1033 = vmor %vm1031, %vm1032
  %v1034 = vsel %vm1033, %v1025, %v1030
  %v1035 = vrsqrt.pop %v755
  %v1036 = vmul.f32 %v1035, %v755
  %v1037 = vmul.f32 %v1036, %v1035
  %v1038 = vmul.f32 0.5, %v1037
  %v1039 = vsub.f32 1.5, %v1038
  %v1040 = vmul.f32 %v1035, %v1039
  %vm1041 = vweird.f32 %v755
  %vm1042 = vweird.f32 %v1035
  %vm1043 = vmor %vm1041, %vm1042
  %v1044 = vsel %vm1043, %v1035, %v1040
  %v1045 = vrsqrt.pop %v756
  %v1046 = vmul.f32 %v1045, %v756
  %v1047 = vmul.f32 %v1046, %v1045
  %v1048 = vmul.f32 0.5, %v1047
  %v1049 = vsub.f32 1.5, %v1048
  %v1050 = vmul.f32 %v1045, %v1049
  %vm1051 = vweird.f32 %v756
  %vm1052 = vweird.f32 %v1045
  %vm1053 = vmor %vm1051, %vm1052
  %v1054 = vsel %vm1053, %v1045, %v1050
  %v1055 = vrsqrt.pop %v757
  %v1056 = vmul.f32 %v1055, %v757
  %v1057 = vmul.f32 %v1056, %v1055
  %v1058 = vmul.f32 0.5, %v1057
  %v1059 = vsub.f32 1.5, %v1058
  %v1060 = vmul.f32 %v1055, %v1059
  %vm1061 = vweird.f32 %v757
  %vm1062 = vweird.f32 %v1055
  %vm1063 = vmor %vm1061, %vm1062
  %v1064 = vsel %vm1063, %v1055, %v1060
  %v1065 = vrsqrt.pop %v758
  %v1066 = vmul.f32 %v1065, %v758
  %v1067 = vmul.f32 %v1066, %v1065
  %v1068 = vmul.f32 0.5, %v1067
  %v1069 = vsub.f32 1.5, %v1068
  %v1070 = vmul.f32 %v1065, %v1069
  %vm1071 = vweird.f32 %v758
  %vm1072 = vweird.f32 %v1065
  %vm1073 = vmor %vm1071, %vm1072
  %v1074 = vsel %vm1073, %v1065, %v1070
  %v1075 = vrsqrt.pop %v759
  %v1076 = vmul.f32 %v1075, %v759
  %v1077 = vmul.f32 %v1076, %v1075
  %v1078 = vmul.f32 0.5, %v1077
  %v1079 = vsub.f32 1.5, %v1078
  %v1080 = vmul.f32 %v1075, %v1079
  %vm1081 = vweird.f32 %v759
  %vm1082 = vweird.f32 %v1075
  %vm1083 = vmor %vm1081, %vm1082
  %v1084 = vsel %vm1083, %v1075, %v1080
  %v1085 = vrsqrt.pop %v760
  %v1086 = vmul.f32 %v1085, %v760
  %v1087 = vmul.f32 %v1086, %v1085
  %v1088 = vmul.f32 0.5, %v1087
  %v1089 = vsub.f32 1.5, %v1088
  %v1090 = vmul.f32 %v1085, %v1089
  %vm1091 = vweird.f32 %v760
  %vm1092 = vweird.f32 %v1085
  %vm1093 = vmor %vm1091, %vm1092
  %v1094 = vsel %vm1093, %v1085, %v1090
  %v1095 = vrsqrt.pop %v761
  %v1096 = vmul.f32 %v1095, %v761
  %v1097 = vmul.f32 %v1096, %v1095
  %v1098 = vmul.f32 0.5, %v1097
  %v1099 = vsub.f32 1.5, %v1098
  %v1100 = vmul.f32 %v1095, %v1099
  %vm1101 = vweird.f32 %v761
  %vm1102 = vweird.f32 %v1095
  %vm1103 = vmor %vm1101, %vm1102
  %v1104 = vsel %vm1103, %v1095, %v1100
  %v1105 = vrsqrt.pop %v762
  %v1106 = vmul.f32 %v1105, %v762
  %v1107 = vmul.f32 %v1106, %v1105
  %v1108 = vmul.f32 0.5, %v1107
  %v1109 = vsub.f32 1.5, %v1108
  %v1110 = vmul.f32 %v1105, %v1109
  %vm1111 = vweird.f32 %v762
  %vm1112 = vweird.f32 %v1105
  %vm1113 = vmor %vm1111, %vm1112
  %v1114 = vsel %vm1113, %v1105, %v1110
  %v1115 = vrsqrt.pop %v763
  %v1116 = vmul.f32 %v1115, %v763
  %v1117 = vmul.f32 %v1116, %v1115
  %v1118 = vmul.f32 0.5, %v1117
  %v1119 = vsub.f32 1.5, %v1118
  %v1120 = vmul.f32 %v1115, %v1119
  %vm1121 = vweird.f32 %v763
  %vm1122 = vweird.f32 %v1115
  %vm1123 = vmor %vm1121, %vm1122
  %v1124 = vsel %vm1123, %v1115, %v1120
  %v1125 = vrsqrt.pop %v764
  %v1126 = vmul.f32 %v1125, %v764
  %v1127 = vmul.f32 %v1126, %v1125
  %v1128 = vmul.f32 0.5, %v1127
  %v1129 = vsub.f32 1.5, %v1128
  %v1130 = vmul.f32 %v1125, %v1129
  %vm1131 = vweird.f32 %v764
  %vm1132 = vweird.f32 %v1125
  %vm1133 = vmor %vm1131, %vm1132
  %v1134 = vsel %vm1133, %v1125, %v1130
  %v1135 = vrsqrt.pop %v765
  %v1136 = vmul.f32 %v1135, %v765
  %v1137 = vmul.f32 %v1136, %v1135
  %v1138 = vmul.f32 0.5, %v1137
  %v1139 = vsub.f32 1.5, %v1138
  %v1140 = vmul.f32 %v1135, %v1139
  %vm1141 = vweird.f32 %v765
  %vm1142 = vweird.f32 %v1135
  %vm1143 = vmor %vm1141, %vm1142
  %v1144 = vsel %vm1143, %v1135, %v1140
  %v1145 = vrsqrt.pop %v766
  %v1146 = vmul.f32 %v1145, %v766
  %v1147 = vmul.f32 %v1146, %v1145
  %v1148 = vmul.f32 0.5, %v1147
  %v1149 = vsub.f32 1.5, %v1148
  %v1150 = vmul.f32 %v1145, %v1149
  %vm1151 = vweird.f32 %v766
  %vm1152 = vweird.f32 %v1145
  %vm1153 = vmor %vm1151, %vm1152
  %v1154 = vsel %vm1153, %v1145, %v1150
  %v1155 = vrsqrt.pop %v767
  %v1156 = vmul.f32 %v1155, %v767
  %v1157 = vmul.f32 %v1156, %v1155
  %v1158 = vmul.f32 0.5, %v1157
  %v1159 = vsub.f32 1.5, %v1158
  %v1160 = vmul.f32 %v1155, %v1159
  %vm1161 = vweird.f32 %v767
  %vm1162 = vweird.f32 %v1155
  %vm1163 = vmor %vm1161, %vm1162
  %v1164 = vsel %vm1163, %v1155, %v1160
  %v1165 = vrsqrt.pop %v768
  %v1166 = vmul.f32 %v1165, %v768
  %v1167 = vmul.f32 %v1166, %v1165
  %v1168 = vmul.f32 0.5, %v1167
  %v1169 = vsub.f32 1.5, %v1168
  %v1170 = vmul.f32 %v1165, %v1169
  %vm1171 = vweird.f32 %v768
  %vm1172 = vweird.f32 %v1165
  %vm1173 = vmor %vm1171, %vm1172
  %v1174 = vsel %vm1173, %v1165, %v1170
  %v1175 = vrsqrt.pop %v769
  %v1176 = vmul.f32 %v1175, %v769
  %v1177 = vmul.f32 %v1176, %v1175
  %v1178 = vmul.f32 0.5, %v1177
  %v1179 = vsub.f32 1.5, %v1178
  %v1180 = vmul.f32 %v1175, %v1179
  %vm1181 = vweird.f32 %v769
  %vm1182 = vweird.f32 %v1175
  %vm1183 = vmor %vm1181, %vm1182
  %v1184 = vsel %vm1183, %v1175, %v1180
  %v1185 = vrsqrt.pop %v770
  %v1186 = vmul.f32 %v1185, %v770
  %v1187 = vmul.f32 %v1186, %v1185
  %v1188 = vmul.f32 0.5, %v1187
  %v1189 = vsub.f32 1.5, %v1188
  %v1190 = vmul.f32 %v1185, %v1189
  %vm1191 = vweird.f32 %v770
  %vm1192 = vweird.f32 %v1185
  %vm1193 = vmor %vm1191, %vm1192
  %v1194 = vsel %vm1193, %v1185, %v1190
  %v1195 = vrsqrt.pop %v771
  %v1196 = vmul.f32 %v1195, %v771
  %v1197 = vmul.f32 %v1196, %v1195
  %v1198 = vmul.f32 0.5, %v1197
  %v1199 = vsub.f32 1.5, %v1198
  %v1200 = vmul.f32 %v1195, %v1199
  %vm1201 = vweird.f32 %v771
  %vm1202 = vweird.f32 %v1195
  %vm1203 = vmor %vm1201, %vm1202
  %v1204 = vsel %vm1203, %v1195, %v1200
  %v1205 = vrsqrt.pop %v772
  %v1206 = vmul.f32 %v1205, %v772
  %v1207 = vmul.f32 %v1206, %v1205
  %v1208 = vmul.f32 0.5, %v1207
  %v1209 = vsub.f32 1.5, %v1208
  %v1210 = vmul.f32 %v1205, %v1209
  %vm1211 = vweird.f32 %v772
  %vm1212 = vweird.f32 %v1205
  %vm1213 = vmor %vm1211, %vm1212
  %v1214 = vsel %vm1213, %v1205, %v1210
  %v1215 = vrsqrt.pop %v773
  %v1216 = vmul.f32 %v1215, %v773
  %v1217 = vmul.f32 %v1216, %v1215
  %v1218 = vmul.f32 0.5, %v1217
  %v1219 = vsub.f32 1.5, %v1218
  %v1220 = vmul.f32 %v1215, %v1219
  %vm1221 = vweird.f32 %v773
  %vm1222 = vweird.f32 %v1215
  %vm1223 = vmor %vm1221, %vm1222
  %v1224 = vsel %vm1223, %v1215, %v1220
  %v1225 = vrsqrt.pop %v774
  %v1226 = vmul.f32 %v1225, %v774
  %v1227 = vmul.f32 %v1226, %v1225
  %v1228 = vmul.f32 0.5, %v1227
  %v1229 = vsub.f32 1.5, %v1228
  %v1230 = vmul.f32 %v1225, %v1229
  %vm1231 = vweird.f32 %v774
  %vm1232 = vweird.f32 %v1225
  %vm1233 = vmor %vm1231, %vm1232
  %v1234 = vsel %vm1233, %v1225, %v1230
  %v1235 = vrsqrt.pop %v775
  %v1236 = vmul.f32 %v1235, %v775
  %v1237 = vmul.f32 %v1236, %v1235
  %v1238 = vmul.f32 0.5, %v1237
  %v1239 = vsub.f32 1.5, %v1238
  %v1240 = vmul.f32 %v1235, %v1239
  %vm1241 = vweird.f32 %v775
  %vm1242 = vweird.f32 %v1235
  %vm1243 = vmor %vm1241, %vm1242
  %v1244 = vsel %vm1243, %v1235, %v1240
  %v1245 = vrsqrt.pop %v776
  %v1246 = vmul.f32 %v1245, %v776
  %v1247 = vmul.f32 %v1246, %v1245
  %v1248 = vmul.f32 0.5, %v1247
  %v1249 = vsub.f32 1.5, %v1248
  %v1250 = vmul.f32 %v1245, %v1249
  %vm1251 = vweird.f32 %v776
  %vm1252 = vweird.f32 %v1245
  %vm1253 = vmor %vm1251, %vm1252
  %v1254 = vsel %vm1253, %v1245, %v1250
  %v1255 = vrsqrt.pop %v777
  %v1256 = vmul.f32 %v1255, %v777
  %v1257 = vmul.f32 %v1256, %v1255
  %v1258 = vmul.f32 0.5, %v1257
  %v1259 = vsub.f32 1.5, %v1258
  %v1260 = vmul.f32 %v1255, %v1259
  %vm1261 = vweird.f32 %v777
  %vm1262 = vweird.f32 %v1255
  %vm1263 = vmor %vm1261, %vm1262
  %v1264 = vsel %vm1263, %v1255, %v1260
  %v1265 = vrsqrt.pop %v778
  %v1266 = vmul.f32 %v1265, %v778
  %v1267 = vmul.f32 %v1266, %v1265
  %v1268 = vmul.f32 0.5, %v1267
  %v1269 = vsub.f32 1.5, %v1268
  %v1270 = vmul.f32 %v1265, %v1269
  %vm1271 = vweird.f32 %v778
  %vm1272 = vweird.f32 %v1265
  %vm1273 = vmor %vm1271, %vm1272
  %v1274 = vsel %vm1273, %v1265, %v1270
  %v1275 = vrsqrt.pop %v779
  %v1276 = vmul.f32 %v1275, %v779
  %v1277 = vmul.f32 %v1276, %v1275
  %v1278 = vmul.f32 0.5, %v1277
  %v1279 = vsub.f32 1.5, %v1278
  %v1280 = vmul.f32 %v1275, %v1279
  %vm1281 = vweird.f32 %v779
  %vm1282 = vweird.f32 %v1275
  %vm1283 = vmor %vm1281, %vm1282
  %v1284 = vsel %vm1283, %v1275, %v1280
  %v1285 = vrsqrt.pop %v780
  %v1286 = vmul.f32 %v1285, %v780
  %v1287 = vmul.f32 %v1286, %v1285
  %v1288 = vmul.f32 0.5, %v1287
  %v1289 = vsub.f32 1.5, %v1288
  %v1290 = vmul.f32 %v1285, %v1289
  %vm1291 = vweird.f32 %v780
  %vm1292 = vweird.f32 %v1285
  %vm1293 = vmor %vm1291, %vm1292
  %v1294 = vsel %vm1293, %v1285, %v1290
  %v1295 = vrsqrt.pop %v781
  %v1296 = vmul.f32 %v1295, %v781
  %v1297 = vmul.f32 %v1296, %v1295
  %v1298 = vmul.f32 0.5, %v1297
  %v1299 = vsub.f32 1.5, %v1298
  %v1300 = vmul.f32 %v1295, %v1299
  %vm1301 = vweird.f32 %v781
  %vm1302 = vweird.f32 %v1295
  %vm1303 = vmor %vm1301, %vm1302
  %v1304 = vsel %vm1303, %v1295, %v1300
  %v1305 = vrsqrt.pop %v782
  %v1306 = vmul.f32 %v1305, %v782
  %v1307 = vmul.f32 %v1306, %v1305
  %v1308 = vmul.f32 0.5, %v1307
  %v1309 = vsub.f32 1.5, %v1308
  %v1310 = vmul.f32 %v1305, %v1309
  %vm1311 = vweird.f32 %v782
  %vm1312 = vweird.f32 %v1305
  %vm1313 = vmor %vm1311, %vm1312
  %v1314 = vsel %vm1313, %v1305, %v1310
  %v1315 = vrsqrt.pop %v783
  %v1316 = vmul.f32 %v1315, %v783
  %v1317 = vmul.f32 %v1316, %v1315
  %v1318 = vmul.f32 0.5, %v1317
  %v1319 = vsub.f32 1.5, %v1318
  %v1320 = vmul.f32 %v1315, %v1319
  %vm1321 = vweird.f32 %v783
  %vm1322 = vweird.f32 %v1315
  %vm1323 = vmor %vm1321, %vm1322
  %v1324 = vsel %vm1323, %v1315, %v1320
  %v1325 = vrsqrt.pop %v784
  %v1326 = vmul.f32 %v1325, %v784
  %v1327 = vmul.f32 %v1326, %v1325
  %v1328 = vmul.f32 0.5, %v1327
  %v1329 = vsub.f32 1.5, %v1328
  %v1330 = vmul.f32 %v1325, %v1329
  %vm1331 = vweird.f32 %v784
  %vm1332 = vweird.f32 %v1325
  %vm1333 = vmor %vm1331, %vm1332
  %v1334 = vsel %vm1333, %v1325, %v1330
  %v1335 = vrsqrt.pop %v785
  %v1336 = vmul.f32 %v1335, %v785
  %v1337 = vmul.f32 %v1336, %v1335
  %v1338 = vmul.f32 0.5, %v1337
  %v1339 = vsub.f32 1.5, %v1338
  %v1340 = vmul.f32 %v1335, %v1339
  %vm1341 = vweird.f32 %v785
  %vm1342 = vweird.f32 %v1335
  %vm1343 = vmor %vm1341, %vm1342
  %v1344 = vsel %vm1343, %v1335, %v1340
  %v1345 = vrsqrt.pop %v786
  %v1346 = vmul.f32 %v1345, %v786
  %v1347 = vmul.f32 %v1346, %v1345
  %v1348 = vmul.f32 0.5, %v1347
  %v1349 = vsub.f32 1.5, %v1348
  %v1350 = vmul.f32 %v1345, %v1349
  %vm1351 = vweird.f32 %v786
  %vm1352 = vweird.f32 %v1345
  %vm1353 = vmor %vm1351, %vm1352
  %v1354 = vsel %vm1353, %v1345, %v1350
  %v1355 = vrsqrt.pop %v787
  %v1356 = vmul.f32 %v1355, %v787
  %v1357 = vmul.f32 %v1356, %v1355
  %v1358 = vmul.f32 0.5, %v1357
  %v1359 = vsub.f32 1.5, %v1358
  %v1360 = vmul.f32 %v1355, %v1359
  %vm1361 = vweird.f32 %v787
  %vm1362 = vweird.f32 %v1355
  %vm1363 = vmor %vm1361, %vm1362
  %v1364 = vsel %vm1363, %v1355, %v1360
  %v1365 = vrsqrt.pop %v788
  %v1366 = vmul.f32 %v1365, %v788
  %v1367 = vmul.f32 %v1366, %v1365
  %v1368 = vmul.f32 0.5, %v1367
  %v1369 = vsub.f32 1.5, %v1368
  %v1370 = vmul.f32 %v1365, %v1369
  %vm1371 = vweird.f32 %v788
  %vm1372 = vweird.f32 %v1365
  %vm1373 = vmor %vm1371, %vm1372
  %v1374 = vsel %vm1373, %v1365, %v1370
  %v1375 = vrsqrt.pop %v789
  %v1376 = vmul.f32 %v1375, %v789
  %v1377 = vmul.f32 %v1376, %v1375
  %v1378 = vmul.f32 0.5, %v1377
  %v1379 = vsub.f32 1.5, %v1378
  %v1380 = vmul.f32 %v1375, %v1379
  %vm1381 = vweird.f32 %v789
  %vm1382 = vweird.f32 %v1375
  %vm1383 = vmor %vm1381, %vm1382
  %v1384 = vsel %vm1383, %v1375, %v1380
  %v1385 = vrsqrt.pop %v790
  %v1386 = vmul.f32 %v1385, %v790
  %v1387 = vmul.f32 %v1386, %v1385
  %v1388 = vmul.f32 0.5, %v1387
  %v1389 = vsub.f32 1.5, %v1388
  %v1390 = vmul.f32 %v1385, %v1389
  %vm1391 = vweird.f32 %v790
  %vm1392 = vweird.f32 %v1385
  %vm1393 = vmor %vm1391, %vm1392
  %v1394 = vsel %vm1393, %v1385, %v1390
  %v1395 = vrsqrt.pop %v791
  %v1396 = vmul.f32 %v1395, %v791
  %v1397 = vmul.f32 %v1396, %v1395
  %v1398 = vmul.f32 0.5, %v1397
  %v1399 = vsub.f32 1.5, %v1398
  %v1400 = vmul.f32 %v1395, %v1399
  %vm1401 = vweird.f32 %v791
  %vm1402 = vweird.f32 %v1395
  %vm1403 = vmor %vm1401, %vm1402
  %v1404 = vsel %vm1403, %v1395, %v1400
  %v1405 = vrsqrt.pop %v792
  %v1406 = vmul.f32 %v1405, %v792
  %v1407 = vmul.f32 %v1406, %v1405
  %v1408 = vmul.f32 0.5, %v1407
  %v1409 = vsub.f32 1.5, %v1408
  %v1410 = vmul.f32 %v1405, %v1409
  %vm1411 = vweird.f32 %v792
  %vm1412 = vweird.f32 %v1405
  %vm1413 = vmor %vm1411, %vm1412
  %v1414 = vsel %vm1413, %v1405, %v1410
  %v1415 = vrsqrt.pop %v793
  %v1416 = vmul.f32 %v1415, %v793
  %v1417 = vmul.f32 %v1416, %v1415
  %v1418 = vmul.f32 0.5, %v1417
  %v1419 = vsub.f32 1.5, %v1418
  %v1420 = vmul.f32 %v1415, %v1419
  %vm1421 = vweird.f32 %v793
  %vm1422 = vweird.f32 %v1415
  %vm1423 = vmor %vm1421, %vm1422
  %v1424 = vsel %vm1423, %v1415, %v1420
  %v1425 = vrsqrt.pop %v794
  %v1426 = vmul.f32 %v1425, %v794
  %v1427 = vmul.f32 %v1426, %v1425
  %v1428 = vmul.f32 0.5, %v1427
  %v1429 = vsub.f32 1.5, %v1428
  %v1430 = vmul.f32 %v1425, %v1429
  %vm1431 = vweird.f32 %v794
  %vm1432 = vweird.f32 %v1425
  %vm1433 = vmor %vm1431, %vm1432
  %v1434 = vsel %vm1433, %v1425, %v1430
  %v1435 = vmul.f32 %v347, %v804
  %v1436 = vmul.f32 %v348, %v814
  %v1437 = vmul.f32 %v349, %v824
  %v1438 = vmul.f32 %v350, %v834
  %v1439 = vmul.f32 %v351, %v844
  %v1440 = vmul.f32 %v352, %v854
  %v1441 = vmul.f32 %v353, %v864
  %v1442 = vmul.f32 %v354, %v874
  %v1443 = vmul.f32 %v355, %v884
  %v1444 = vmul.f32 %v356, %v894
  %v1445 = vmul.f32 %v357, %v904
  %v1446 = vmul.f32 %v358, %v914
  %v1447 = vmul.f32 %v359, %v924
  %v1448 = vmul.f32 %v360, %v934
  %v1449 = vmul.f32 %v361, %v944
  %v1450 = vmul.f32 %v362, %v954
  %v1451 = vmul.f32 %v363, %v964
  %v1452 = vmul.f32 %v364, %v974
  %v1453 = vmul.f32 %v365, %v984
  %v1454 = vmul.f32 %v366, %v994
  %v1455 = vmul.f32 %v367, %v1004
  %v1456 = vmul.f32 %v368, %v1014
  %v1457 = vmul.f32 %v369, %v1024
  %v1458 = vmul.f32 %v370, %v1034
  %v1459 = vmul.f32 %v371, %v1044
  %v1460 = vmul.f32 %v372, %v1054
  %v1461 = vmul.f32 %v373, %v1064
  %v1462 = vmul.f32 %v374, %v1074
  %v1463 = vmul.f32 %v375, %v1084
  %v1464 = vmul.f32 %v376, %v1094
  %v1465 = vmul.f32 %v377, %v1104
  %v1466 = vmul.f32 %v378, %v1114
  %v1467 = vmul.f32 %v379, %v1124
  %v1468 = vmul.f32 %v380, %v1134
  %v1469 = vmul.f32 %v381, %v1144
  %v1470 = vmul.f32 %v382, %v1154
  %v1471 = vmul.f32 %v383, %v1164
  %v1472 = vmul.f32 %v384, %v1174
  %v1473 = vmul.f32 %v385, %v1184
  %v1474 = vmul.f32 %v386, %v1194
  %v1475 = vmul.f32 %v387, %v1204
  %v1476 = vmul.f32 %v388, %v1214
  %v1477 = vmul.f32 %v389, %v1224
  %v1478 = vmul.f32 %v390, %v1234
  %v1479 = vmul.f32 %v391, %v1244
  %v1480 = vmul.f32 %v392, %v1254
  %v1481 = vmul.f32 %v393, %v1264
  %v1482 = vmul.f32 %v394, %v1274
  %v1483 = vmul.f32 %v395, %v1284
  %v1484 = vmul.f32 %v396, %v1294
  %v1485 = vmul.f32 %v397, %v1304
  %v1486 = vmul.f32 %v398, %v1314
  %v1487 = vmul.f32 %v399, %v1324
  %v1488 = vmul.f32 %v400, %v1334
  %v1489 = vmul.f32 %v401, %v1344
  %v1490 = vmul.f32 %v402, %v1354
  %v1491 = vmul.f32 %v403, %v1364
  %v1492 = vmul.f32 %v404, %v1374
  %v1493 = vmul.f32 %v405, %v1384
  %v1494 = vmul.f32 %v406, %v1394
  %v1495 = vmul.f32 %v407, %v1404
  %v1496 = vmul.f32 %v408, %v1414
  %v1497 = vmul.f32 %v409, %v1424
  %v1498 = vmul.f32 %v410, %v1434
  %v1500 = vperm.slane %v81, 0
  %v1502 = vmul.f32 %v1435, %v1500
  %v1503 = vmul.f32 %v1436, %v1500
  %v1504 = vmul.f32 %v1437, %v1500
  %v1505 = vmul.f32 %v1438, %v1500
  %v1506 = vmul.f32 %v1439, %v1500
  %v1507 = vmul.f32 %v1440, %v1500
  %v1508 = vmul.f32 %v1441, %v1500
  %v1509 = vmul.f32 %v1442, %v1500
  %v1510 = vmul.f32 %v1443, %v1500
  %v1511 = vmul.f32 %v1444, %v1500
  %v1512 = vmul.f32 %v1445, %v1500
  %v1513 = vmul.f32 %v1446, %v1500
  %v1514 = vmul.f32 %v1447, %v1500
  %v1515 = vmul.f32 %v1448, %v1500
  %v1516 = vmul.f32 %v1449, %v1500
  %v1517 = vmul.f32 %v1450, %v1500
  %v1518 = vmul.f32 %v1451, %v1500
  %v1519 = vmul.f32 %v1452, %v1500
  %v1520 = vmul.f32 %v1453, %v1500
  %v1521 = vmul.f32 %v1454, %v1500
  %v1522 = vmul.f32 %v1455, %v1500
  %v1523 = vmul.f32 %v1456, %v1500
  %v1524 = vmul.f32 %v1457, %v1500
  %v1525 = vmul.f32 %v1458, %v1500
  %v1526 = vmul.f32 %v1459, %v1500
  %v1527 = vmul.f32 %v1460, %v1500
  %v1528 = vmul.f32 %v1461, %v1500
  %v1529 = vmul.f32 %v1462, %v1500
  %v1530 = vmul.f32 %v1463, %v1500
  %v1531 = vmul.f32 %v1464, %v1500
  %v1532 = vmul.f32 %v1465, %v1500
  %v1533 = vmul.f32 %v1466, %v1500
  %v1534 = vmul.f32 %v1467, %v1500
  %v1535 = vmul.f32 %v1468, %v1500
  %v1536 = vmul.f32 %v1469, %v1500
  %v1537 = vmul.f32 %v1470, %v1500
  %v1538 = vmul.f32 %v1471, %v1500
  %v1539 = vmul.f32 %v1472, %v1500
  %v1540 = vmul.f32 %v1473, %v1500
  %v1541 = vmul.f32 %v1474, %v1500
  %v1542 = vmul.f32 %v1475, %v1500
  %v1543 = vmul.f32 %v1476, %v1500
  %v1544 = vmul.f32 %v1477, %v1500
  %v1545 = vmul.f32 %v1478, %v1500
  %v1546 = vmul.f32 %v1479, %v1500
  %v1547 = vmul.f32 %v1480, %v1500
  %v1548 = vmul.f32 %v1481, %v1500
  %v1549 = vmul.f32 %v1482, %v1500
  %v1550 = vmul.f32 %v1483, %v1500
  %v1551 = vmul.f32 %v1484, %v1500
  %v1552 = vmul.f32 %v1485, %v1500
  %v1553 = vmul.f32 %v1486, %v1500
  %v1554 = vmul.f32 %v1487, %v1500
  %v1555 = vmul.f32 %v1488, %v1500
  %v1556 = vmul.f32 %v1489, %v1500
  %v1557 = vmul.f32 %v1490, %v1500
  %v1558 = vmul.f32 %v1491, %v1500
  %v1559 = vmul.f32 %v1492, %v1500
  %v1560 = vmul.f32 %v1493, %v1500
  %v1561 = vmul.f32 %v1494, %v1500
  %v1562 = vmul.f32 %v1495, %v1500
  %v1563 = vmul.f32 %v1496, %v1500
  %v1564 = vmul.f32 %v1497, %v1500
  %v1565 = vmul.f32 %v1498, %v1500
  %v1567 = vperm.slane %v82, 0
  %v1569 = vadd.f32 %v1502, %v1567
  %v1570 = vadd.f32 %v1503, %v1567
  %v1571 = vadd.f32 %v1504, %v1567
  %v1572 = vadd.f32 %v1505, %v1567
  %v1573 = vadd.f32 %v1506, %v1567
  %v1574 = vadd.f32 %v1507, %v1567
  %v1575 = vadd.f32 %v1508, %v1567
  %v1576 = vadd.f32 %v1509, %v1567
  %v1577 = vadd.f32 %v1510, %v1567
  %v1578 = vadd.f32 %v1511, %v1567
  %v1579 = vadd.f32 %v1512, %v1567
  %v1580 = vadd.f32 %v1513, %v1567
  %v1581 = vadd.f32 %v1514, %v1567
  %v1582 = vadd.f32 %v1515, %v1567
  %v1583 = vadd.f32 %v1516, %v1567
  %v1584 = vadd.f32 %v1517, %v1567
  %v1585 = vadd.f32 %v1518, %v1567
  %v1586 = vadd.f32 %v1519, %v1567
  %v1587 = vadd.f32 %v1520, %v1567
  %v1588 = vadd.f32 %v1521, %v1567
  %v1589 = vadd.f32 %v1522, %v1567
  %v1590 = vadd.f32 %v1523, %v1567
  %v1591 = vadd.f32 %v1524, %v1567
  %v1592 = vadd.f32 %v1525, %v1567
  %v1593 = vadd.f32 %v1526, %v1567
  %v1594 = vadd.f32 %v1527, %v1567
  %v1595 = vadd.f32 %v1528, %v1567
  %v1596 = vadd.f32 %v1529, %v1567
  %v1597 = vadd.f32 %v1530, %v1567
  %v1598 = vadd.f32 %v1531, %v1567
  %v1599 = vadd.f32 %v1532, %v1567
  %v1600 = vadd.f32 %v1533, %v1567
  %v1601 = vadd.f32 %v1534, %v1567
  %v1602 = vadd.f32 %v1535, %v1567
  %v1603 = vadd.f32 %v1536, %v1567
  %v1604 = vadd.f32 %v1537, %v1567
  %v1605 = vadd.f32 %v1538, %v1567
  %v1606 = vadd.f32 %v1539, %v1567
  %v1607 = vadd.f32 %v1540, %v1567
  %v1608 = vadd.f32 %v1541, %v1567
  %v1609 = vadd.f32 %v1542, %v1567
  %v1610 = vadd.f32 %v1543, %v1567
  %v1611 = vadd.f32 %v1544, %v1567
  %v1612 = vadd.f32 %v1545, %v1567
  %v1613 = vadd.f32 %v1546, %v1567
  %v1614 = vadd.f32 %v1547, %v1567
  %v1615 = vadd.f32 %v1548, %v1567
  %v1616 = vadd.f32 %v1549, %v1567
  %v1617 = vadd.f32 %v1550, %v1567
  %v1618 = vadd.f32 %v1551, %v1567
  %v1619 = vadd.f32 %v1552, %v1567
  %v1620 = vadd.f32 %v1553, %v1567
  %v1621 = vadd.f32 %v1554, %v1567
  %v1622 = vadd.f32 %v1555, %v1567
  %v1623 = vadd.f32 %v1556, %v1567
  %v1624 = vadd.f32 %v1557, %v1567
  %v1625 = vadd.f32 %v1558, %v1567
  %v1626 = vadd.f32 %v1559, %v1567
  %v1627 = vadd.f32 %v1560, %v1567
  %v1628 = vadd.f32 %v1561, %v1567
  %v1629 = vadd.f32 %v1562, %v1567
  %v1630 = vadd.f32 %v1563, %v1567
  %v1631 = vadd.f32 %v1564, %v1567
  %v1632 = vadd.f32 %v1565, %v1567
  %v1633 = vld [vmem:[%s3] sm:$0xff]
  %v1634 = vld [vmem:[%s3 + $0x8] sm:$0xff]
  %v1636 = vsel %vm83, %v1569, 0
  %v1639 = vsel %vm83, %v1570, 0
  %v1642 = vsel %vm83, %v1571, 0
  %v1645 = vsel %vm83, %v1572, 0
  %v1648 = vsel %vm83, %v1573, 0
  %v1651 = vsel %vm83, %v1574, 0
  %v1654 = vsel %vm83, %v1575, 0
  %v1657 = vsel %vm83, %v1576, 0
  %v1660 = vsel %vm83, %v1577, 0
  %v1663 = vsel %vm83, %v1578, 0
  %v1666 = vsel %vm83, %v1579, 0
  %v1669 = vsel %vm83, %v1580, 0
  %v1672 = vsel %vm83, %v1581, 0
  %v1675 = vsel %vm83, %v1582, 0
  %v1678 = vsel %vm83, %v1583, 0
  %v1681 = vsel %vm83, %v1584, 0
  %v1684 = vsel %vm83, %v1585, 0
  %v1687 = vsel %vm83, %v1586, 0
  %v1690 = vsel %vm83, %v1587, 0
  %v1693 = vsel %vm83, %v1588, 0
  %v1696 = vsel %vm83, %v1589, 0
  %v1699 = vsel %vm83, %v1590, 0
  %v1702 = vsel %vm83, %v1591, 0
  %v1705 = vsel %vm83, %v1592, 0
  %v1708 = vsel %vm83, %v1593, 0
  %v1711 = vsel %vm83, %v1594, 0
  %v1714 = vsel %vm83, %v1595, 0
  %v1717 = vsel %vm83, %v1596, 0
  %v1720 = vsel %vm83, %v1597, 0
  %v1723 = vsel %vm83, %v1598, 0
  %v1726 = vsel %vm83, %v1599, 0
  %v1729 = vsel %vm83, %v1600, 0
  %v1732 = vsel %vm83, %v1601, 0
  %v1735 = vsel %vm83, %v1602, 0
  %v1738 = vsel %vm83, %v1603, 0
  %v1741 = vsel %vm83, %v1604, 0
  %v1744 = vsel %vm83, %v1605, 0
  %v1747 = vsel %vm83, %v1606, 0
  %v1750 = vsel %vm83, %v1607, 0
  %v1753 = vsel %vm83, %v1608, 0
  %v1756 = vsel %vm83, %v1609, 0
  %v1759 = vsel %vm83, %v1610, 0
  %v1762 = vsel %vm83, %v1611, 0
  %v1765 = vsel %vm83, %v1612, 0
  %v1768 = vsel %vm83, %v1613, 0
  %v1771 = vsel %vm83, %v1614, 0
  %v1774 = vsel %vm83, %v1615, 0
  %v1777 = vsel %vm83, %v1616, 0
  %v1780 = vsel %vm83, %v1617, 0
  %v1783 = vsel %vm83, %v1618, 0
  %v1786 = vsel %vm83, %v1619, 0
  %v1789 = vsel %vm83, %v1620, 0
  %v1792 = vsel %vm83, %v1621, 0
  %v1795 = vsel %vm83, %v1622, 0
  %v1798 = vsel %vm83, %v1623, 0
  %v1801 = vsel %vm83, %v1624, 0
  %v1804 = vsel %vm83, %v1625, 0
  %v1807 = vsel %vm83, %v1626, 0
  %v1810 = vsel %vm83, %v1627, 0
  %v1813 = vsel %vm83, %v1628, 0
  %v1816 = vsel %vm83, %v1629, 0
  %v1819 = vsel %vm83, %v1630, 0
  %v1822 = vsel %vm83, %v1631, 0
  %v1825 = vsel %vm83, %v1632, 0
  %1827 = vmatpush.msra.mxu0 0.0
  %1828 = vmatpush.msra.mxu0 0.0
  %1829 = vmatpush.msra.mxu0 0.0
  %1830 = vmatpush.msra.mxu0 0.0
  %1831 = vmatpush.msra.mxu0 0.0
  %1832 = vmatpush.msra.mxu0 0.0
  %1833 = vmatpush.msra.mxu0 0.0
  %1834 = vmatpush.msra.mxu0 0.0
  %1835 = vmatpush.msra.mxu0 0.0
  %1836 = vmatpush.msra.mxu0 0.0
  %1837 = vmatpush.msra.mxu0 0.0
  %1838 = vmatpush.msra.mxu0 0.0
  %1839 = vmatpush.msra.mxu0 0.0
  %1840 = vmatpush.msra.mxu0 0.0
  %1841 = vmatpush.msra.mxu0 %v1634
  %1842 = vmatpush.msra.mxu0 %v1633
  %1843 = vmatmul.f32.gmra.mxu0 %v1636
  %v1844 = vpop.f32.mrf.mxu0
  %v1845 = vadd.f32 0.0, %v1844
  %1846 = vmatmul.f32.gmra.mxu0 %v1639
  %v1847 = vpop.f32.mrf.mxu0
  %v1848 = vadd.f32 0.0, %v1847
  %1849 = vmatmul.f32.gmra.mxu0 %v1642
  %v1850 = vpop.f32.mrf.mxu0
  %v1851 = vadd.f32 0.0, %v1850
  %1852 = vmatmul.f32.gmra.mxu0 %v1645
  %v1853 = vpop.f32.mrf.mxu0
  %v1854 = vadd.f32 0.0, %v1853
  %1855 = vmatmul.f32.gmra.mxu0 %v1648
  %v1856 = vpop.f32.mrf.mxu0
  %v1857 = vadd.f32 0.0, %v1856
  %1858 = vmatmul.f32.gmra.mxu0 %v1651
  %v1859 = vpop.f32.mrf.mxu0
  %v1860 = vadd.f32 0.0, %v1859
  %1861 = vmatmul.f32.gmra.mxu0 %v1654
  %v1862 = vpop.f32.mrf.mxu0
  %v1863 = vadd.f32 0.0, %v1862
  %1864 = vmatmul.f32.gmra.mxu0 %v1657
  %v1865 = vpop.f32.mrf.mxu0
  %v1866 = vadd.f32 0.0, %v1865
  %1867 = vmatmul.f32.gmra.mxu0 %v1660
  %v1868 = vpop.f32.mrf.mxu0
  %v1869 = vadd.f32 0.0, %v1868
  %1870 = vmatmul.f32.gmra.mxu0 %v1663
  %v1871 = vpop.f32.mrf.mxu0
  %v1872 = vadd.f32 0.0, %v1871
  %1873 = vmatmul.f32.gmra.mxu0 %v1666
  %v1874 = vpop.f32.mrf.mxu0
  %v1875 = vadd.f32 0.0, %v1874
  %1876 = vmatmul.f32.gmra.mxu0 %v1669
  %v1877 = vpop.f32.mrf.mxu0
  %v1878 = vadd.f32 0.0, %v1877
  %1879 = vmatmul.f32.gmra.mxu0 %v1672
  %v1880 = vpop.f32.mrf.mxu0
  %v1881 = vadd.f32 0.0, %v1880
  %1882 = vmatmul.f32.gmra.mxu0 %v1675
  %v1883 = vpop.f32.mrf.mxu0
  %v1884 = vadd.f32 0.0, %v1883
  %1885 = vmatmul.f32.gmra.mxu0 %v1678
  %v1886 = vpop.f32.mrf.mxu0
  %v1887 = vadd.f32 0.0, %v1886
  %1888 = vmatmul.f32.gmra.mxu0 %v1681
  %v1889 = vpop.f32.mrf.mxu0
  %v1890 = vadd.f32 0.0, %v1889
  %1891 = vmatmul.f32.gmra.mxu0 %v1684
  %v1892 = vpop.f32.mrf.mxu0
  %v1893 = vadd.f32 0.0, %v1892
  %1894 = vmatmul.f32.gmra.mxu0 %v1687
  %v1895 = vpop.f32.mrf.mxu0
  %v1896 = vadd.f32 0.0, %v1895
  %1897 = vmatmul.f32.gmra.mxu0 %v1690
  %v1898 = vpop.f32.mrf.mxu0
  %v1899 = vadd.f32 0.0, %v1898
  %1900 = vmatmul.f32.gmra.mxu0 %v1693
  %v1901 = vpop.f32.mrf.mxu0
  %v1902 = vadd.f32 0.0, %v1901
  %1903 = vmatmul.f32.gmra.mxu0 %v1696
  %v1904 = vpop.f32.mrf.mxu0
  %v1905 = vadd.f32 0.0, %v1904
  %1906 = vmatmul.f32.gmra.mxu0 %v1699
  %v1907 = vpop.f32.mrf.mxu0
  %v1908 = vadd.f32 0.0, %v1907
  %1909 = vmatmul.f32.gmra.mxu0 %v1702
  %v1910 = vpop.f32.mrf.mxu0
  %v1911 = vadd.f32 0.0, %v1910
  %1912 = vmatmul.f32.gmra.mxu0 %v1705
  %v1913 = vpop.f32.mrf.mxu0
  %v1914 = vadd.f32 0.0, %v1913
  %1915 = vmatmul.f32.gmra.mxu0 %v1708
  %v1916 = vpop.f32.mrf.mxu0
  %v1917 = vadd.f32 0.0, %v1916
  %1918 = vmatmul.f32.gmra.mxu0 %v1711
  %v1919 = vpop.f32.mrf.mxu0
  %v1920 = vadd.f32 0.0, %v1919
  %1921 = vmatmul.f32.gmra.mxu0 %v1714
  %v1922 = vpop.f32.mrf.mxu0
  %v1923 = vadd.f32 0.0, %v1922
  %1924 = vmatmul.f32.gmra.mxu0 %v1717
  %v1925 = vpop.f32.mrf.mxu0
  %v1926 = vadd.f32 0.0, %v1925
  %1927 = vmatmul.f32.gmra.mxu0 %v1720
  %v1928 = vpop.f32.mrf.mxu0
  %v1929 = vadd.f32 0.0, %v1928
  %1930 = vmatmul.f32.gmra.mxu0 %v1723
  %v1931 = vpop.f32.mrf.mxu0
  %v1932 = vadd.f32 0.0, %v1931
  %1933 = vmatmul.f32.gmra.mxu0 %v1726
  %v1934 = vpop.f32.mrf.mxu0
  %v1935 = vadd.f32 0.0, %v1934
  %1936 = vmatmul.f32.gmra.mxu0 %v1729
  %v1937 = vpop.f32.mrf.mxu0
  %v1938 = vadd.f32 0.0, %v1937
  %1939 = vmatmul.f32.gmra.mxu0 %v1732
  %v1940 = vpop.f32.mrf.mxu0
  %v1941 = vadd.f32 0.0, %v1940
  %1942 = vmatmul.f32.gmra.mxu0 %v1735
  %v1943 = vpop.f32.mrf.mxu0
  %v1944 = vadd.f32 0.0, %v1943
  %1945 = vmatmul.f32.gmra.mxu0 %v1738
  %v1946 = vpop.f32.mrf.mxu0
  %v1947 = vadd.f32 0.0, %v1946
  %1948 = vmatmul.f32.gmra.mxu0 %v1741
  %v1949 = vpop.f32.mrf.mxu0
  %v1950 = vadd.f32 0.0, %v1949
  %1951 = vmatmul.f32.gmra.mxu0 %v1744
  %v1952 = vpop.f32.mrf.mxu0
  %v1953 = vadd.f32 0.0, %v1952
  %1954 = vmatmul.f32.gmra.mxu0 %v1747
  %v1955 = vpop.f32.mrf.mxu0
  %v1956 = vadd.f32 0.0, %v1955
  %1957 = vmatmul.f32.gmra.mxu0 %v1750
  %v1958 = vpop.f32.mrf.mxu0
  %v1959 = vadd.f32 0.0, %v1958
  %1960 = vmatmul.f32.gmra.mxu0 %v1753
  %v1961 = vpop.f32.mrf.mxu0
  %v1962 = vadd.f32 0.0, %v1961
  %1963 = vmatmul.f32.gmra.mxu0 %v1756
  %v1964 = vpop.f32.mrf.mxu0
  %v1965 = vadd.f32 0.0, %v1964
  %1966 = vmatmul.f32.gmra.mxu0 %v1759
  %v1967 = vpop.f32.mrf.mxu0
  %v1968 = vadd.f32 0.0, %v1967
  %1969 = vmatmul.f32.gmra.mxu0 %v1762
  %v1970 = vpop.f32.mrf.mxu0
  %v1971 = vadd.f32 0.0, %v1970
  %1972 = vmatmul.f32.gmra.mxu0 %v1765
  %v1973 = vpop.f32.mrf.mxu0
  %v1974 = vadd.f32 0.0, %v1973
  %1975 = vmatmul.f32.gmra.mxu0 %v1768
  %v1976 = vpop.f32.mrf.mxu0
  %v1977 = vadd.f32 0.0, %v1976
  %1978 = vmatmul.f32.gmra.mxu0 %v1771
  %v1979 = vpop.f32.mrf.mxu0
  %v1980 = vadd.f32 0.0, %v1979
  %1981 = vmatmul.f32.gmra.mxu0 %v1774
  %v1982 = vpop.f32.mrf.mxu0
  %v1983 = vadd.f32 0.0, %v1982
  %1984 = vmatmul.f32.gmra.mxu0 %v1777
  %v1985 = vpop.f32.mrf.mxu0
  %v1986 = vadd.f32 0.0, %v1985
  %1987 = vmatmul.f32.gmra.mxu0 %v1780
  %v1988 = vpop.f32.mrf.mxu0
  %v1989 = vadd.f32 0.0, %v1988
  %1990 = vmatmul.f32.gmra.mxu0 %v1783
  %v1991 = vpop.f32.mrf.mxu0
  %v1992 = vadd.f32 0.0, %v1991
  %1993 = vmatmul.f32.gmra.mxu0 %v1786
  %v1994 = vpop.f32.mrf.mxu0
  %v1995 = vadd.f32 0.0, %v1994
  %1996 = vmatmul.f32.gmra.mxu0 %v1789
  %v1997 = vpop.f32.mrf.mxu0
  %v1998 = vadd.f32 0.0, %v1997
  %1999 = vmatmul.f32.gmra.mxu0 %v1792
  %v2000 = vpop.f32.mrf.mxu0
  %v2001 = vadd.f32 0.0, %v2000
  %2002 = vmatmul.f32.gmra.mxu0 %v1795
  %v2003 = vpop.f32.mrf.mxu0
  %v2004 = vadd.f32 0.0, %v2003
  %2005 = vmatmul.f32.gmra.mxu0 %v1798
  %v2006 = vpop.f32.mrf.mxu0
  %v2007 = vadd.f32 0.0, %v2006
  %2008 = vmatmul.f32.gmra.mxu0 %v1801
  %v2009 = vpop.f32.mrf.mxu0
  %v2010 = vadd.f32 0.0, %v2009
  %2011 = vmatmul.f32.gmra.mxu0 %v1804
  %v2012 = vpop.f32.mrf.mxu0
  %v2013 = vadd.f32 0.0, %v2012
  %2014 = vmatmul.f32.gmra.mxu0 %v1807
  %v2015 = vpop.f32.mrf.mxu0
  %v2016 = vadd.f32 0.0, %v2015
  %2017 = vmatmul.f32.gmra.mxu0 %v1810
  %v2018 = vpop.f32.mrf.mxu0
  %v2019 = vadd.f32 0.0, %v2018
  %2020 = vmatmul.f32.gmra.mxu0 %v1813
  %v2021 = vpop.f32.mrf.mxu0
  %v2022 = vadd.f32 0.0, %v2021
  %2023 = vmatmul.f32.gmra.mxu0 %v1816
  %v2024 = vpop.f32.mrf.mxu0
  %v2025 = vadd.f32 0.0, %v2024
  %2026 = vmatmul.f32.gmra.mxu0 %v1819
  %v2027 = vpop.f32.mrf.mxu0
  %v2028 = vadd.f32 0.0, %v2027
  %2029 = vmatmul.f32.gmra.mxu0 %v1822
  %v2030 = vpop.f32.mrf.mxu0
  %v2031 = vadd.f32 0.0, %v2030
  %2032 = vmatmul.f32.gmra.mxu0 %v1825
  %v2033 = vpop.f32.mrf.mxu0
  %v2034 = vadd.f32 0.0, %v2033
  %2035 = vdwg.mxu0
  %vm2036 = vcmask 392192
  %2037 = vst.msk [vmem:[%s4] sm:$0xff] %vm2036, %v1845
  %2038 = vst.msk [vmem:[%s4 + $0x8] sm:$0xff] %vm2036, %v1848
  %2039 = vst.msk [vmem:[%s4 + $0x10] sm:$0xff] %vm2036, %v1851
  %2040 = vst.msk [vmem:[%s4 + $0x18] sm:$0xff] %vm2036, %v1854
  %2041 = vst.msk [vmem:[%s4 + $0x20] sm:$0xff] %vm2036, %v1857
  %2042 = vst.msk [vmem:[%s4 + $0x28] sm:$0xff] %vm2036, %v1860
  %2043 = vst.msk [vmem:[%s4 + $0x30] sm:$0xff] %vm2036, %v1863
  %2044 = vst.msk [vmem:[%s4 + $0x38] sm:$0xff] %vm2036, %v1866
  %2045 = vst.msk [vmem:[%s4 + $0x40] sm:$0xff] %vm2036, %v1869
  %2046 = vst.msk [vmem:[%s4 + $0x48] sm:$0xff] %vm2036, %v1872
  %2047 = vst.msk [vmem:[%s4 + $0x50] sm:$0xff] %vm2036, %v1875
  %2048 = vst.msk [vmem:[%s4 + $0x58] sm:$0xff] %vm2036, %v1878
  %2049 = vst.msk [vmem:[%s4 + $0x60] sm:$0xff] %vm2036, %v1881
  %2050 = vst.msk [vmem:[%s4 + $0x68] sm:$0xff] %vm2036, %v1884
  %2051 = vst.msk [vmem:[%s4 + $0x70] sm:$0xff] %vm2036, %v1887
  %2052 = vst.msk [vmem:[%s4 + $0x78] sm:$0xff] %vm2036, %v1890
  %2053 = vst.msk [vmem:[%s4 + $0x80] sm:$0xff] %vm2036, %v1893
  %2054 = vst.msk [vmem:[%s4 + $0x88] sm:$0xff] %vm2036, %v1896
  %2055 = vst.msk [vmem:[%s4 + $0x90] sm:$0xff] %vm2036, %v1899
  %2056 = vst.msk [vmem:[%s4 + $0x98] sm:$0xff] %vm2036, %v1902
  %2057 = vst.msk [vmem:[%s4 + $0xa0] sm:$0xff] %vm2036, %v1905
  %2058 = vst.msk [vmem:[%s4 + $0xa8] sm:$0xff] %vm2036, %v1908
  %2059 = vst.msk [vmem:[%s4 + $0xb0] sm:$0xff] %vm2036, %v1911
  %2060 = vst.msk [vmem:[%s4 + $0xb8] sm:$0xff] %vm2036, %v1914
  %2061 = vst.msk [vmem:[%s4 + $0xc0] sm:$0xff] %vm2036, %v1917
  %2062 = vst.msk [vmem:[%s4 + $0xc8] sm:$0xff] %vm2036, %v1920
  %2063 = vst.msk [vmem:[%s4 + $0xd0] sm:$0xff] %vm2036, %v1923
  %2064 = vst.msk [vmem:[%s4 + $0xd8] sm:$0xff] %vm2036, %v1926
  %2065 = vst.msk [vmem:[%s4 + $0xe0] sm:$0xff] %vm2036, %v1929
  %2066 = vst.msk [vmem:[%s4 + $0xe8] sm:$0xff] %vm2036, %v1932
  %2067 = vst.msk [vmem:[%s4 + $0xf0] sm:$0xff] %vm2036, %v1935
  %2068 = vst.msk [vmem:[%s4 + $0xf8] sm:$0xff] %vm2036, %v1938
  %2069 = vst.msk [vmem:[%s4 + $0x100] sm:$0xff] %vm2036, %v1941
  %2070 = vst.msk [vmem:[%s4 + $0x108] sm:$0xff] %vm2036, %v1944
  %2071 = vst.msk [vmem:[%s4 + $0x110] sm:$0xff] %vm2036, %v1947
  %2072 = vst.msk [vmem:[%s4 + $0x118] sm:$0xff] %vm2036, %v1950
  %2073 = vst.msk [vmem:[%s4 + $0x120] sm:$0xff] %vm2036, %v1953
  %2074 = vst.msk [vmem:[%s4 + $0x128] sm:$0xff] %vm2036, %v1956
  %2075 = vst.msk [vmem:[%s4 + $0x130] sm:$0xff] %vm2036, %v1959
  %2076 = vst.msk [vmem:[%s4 + $0x138] sm:$0xff] %vm2036, %v1962
  %2077 = vst.msk [vmem:[%s4 + $0x140] sm:$0xff] %vm2036, %v1965
  %2078 = vst.msk [vmem:[%s4 + $0x148] sm:$0xff] %vm2036, %v1968
  %2079 = vst.msk [vmem:[%s4 + $0x150] sm:$0xff] %vm2036, %v1971
  %2080 = vst.msk [vmem:[%s4 + $0x158] sm:$0xff] %vm2036, %v1974
  %2081 = vst.msk [vmem:[%s4 + $0x160] sm:$0xff] %vm2036, %v1977
  %2082 = vst.msk [vmem:[%s4 + $0x168] sm:$0xff] %vm2036, %v1980
  %2083 = vst.msk [vmem:[%s4 + $0x170] sm:$0xff] %vm2036, %v1983
  %2084 = vst.msk [vmem:[%s4 + $0x178] sm:$0xff] %vm2036, %v1986
  %2085 = vst.msk [vmem:[%s4 + $0x180] sm:$0xff] %vm2036, %v1989
  %2086 = vst.msk [vmem:[%s4 + $0x188] sm:$0xff] %vm2036, %v1992
  %2087 = vst.msk [vmem:[%s4 + $0x190] sm:$0xff] %vm2036, %v1995
  %2088 = vst.msk [vmem:[%s4 + $0x198] sm:$0xff] %vm2036, %v1998
  %2089 = vst.msk [vmem:[%s4 + $0x1a0] sm:$0xff] %vm2036, %v2001
  %2090 = vst.msk [vmem:[%s4 + $0x1a8] sm:$0xff] %vm2036, %v2004
  %2091 = vst.msk [vmem:[%s4 + $0x1b0] sm:$0xff] %vm2036, %v2007
  %2092 = vst.msk [vmem:[%s4 + $0x1b8] sm:$0xff] %vm2036, %v2010
  %2093 = vst.msk [vmem:[%s4 + $0x1c0] sm:$0xff] %vm2036, %v2013
  %2094 = vst.msk [vmem:[%s4 + $0x1c8] sm:$0xff] %vm2036, %v2016
  %2095 = vst.msk [vmem:[%s4 + $0x1d0] sm:$0xff] %vm2036, %v2019
  %2096 = vst.msk [vmem:[%s4 + $0x1d8] sm:$0xff] %vm2036, %v2022
  %2097 = vst.msk [vmem:[%s4 + $0x1e0] sm:$0xff] %vm2036, %v2025
  %2098 = vst.msk [vmem:[%s4 + $0x1e8] sm:$0xff] %vm2036, %v2028
  %2099 = vst.msk [vmem:[%s4 + $0x1f0] sm:$0xff] %vm2036, %v2031
  %2100 = vst.msk [vmem:[%s4 + $0x1f8] sm:$0xff] %vm2036, %v2034
  // Predicated region
  $region18: #{tpu_custom_call.1} parent=0 // pred_check
    _
  $region19: #{tpu_custom_call.1} parent=0 // pred_check_branch
    %2102 = sbr.rel (0) target = $region21
  $region20: #{tpu_custom_call.1} parent=0 // pred_region
    _
  $region21: #{tpu_custom_call.1} parent=0 // pred_fallthru
    _
  // Predicated region
  $region22: #{tpu_custom_call.1} parent=0 // pred_check
    _
  $region23: #{tpu_custom_call.1} parent=0 // pred_check_branch
    %2104 = sbr.rel (0) target = $region25
  $region24: #{tpu_custom_call.1} parent=0 // pred_region
    _
  $region25: #{tpu_custom_call.1} parent=0 // pred_fallthru
    _

</llo_original>
